<compile_context>
chip_gen: v5e
topology: v5e:2x2
jax: 0.10.0
libtpu: 0.0.40
codegen_flags: <defaults>
</compile_context>

<pallas_src>
import functools

import jax
import jax.numpy as jnp
from jax.experimental import pallas as pl

LANE = 128     # TPU lane width: classifier output padded to a multiple of this
SUBLANE = 8    # f32 sublane count: batch padded to a multiple of this


def pcb_kernel(x_ref, keep_ref, w1_ref, bn_ref, w2_ref, b2_ref, out_ref, *, b_real):
    """Single-invocation fused PCB head.

    x_ref    : (Bp, C*P, S)  pooled by sum below (1/S folded into w1)
    keep_ref : (Bp, P*D)     {0,1} dropout keep mask (1/(1-p) folded into bn)
    w1_ref   : (C*P, P*D)    interleaved-block branch weight, pre-scaled by 1/S
    bn_ref   : (2, P*D)      row 0 = gamma/(1-p), row 1 = beta/(1-p)
    w2_ref   : (P*D, Lpad)   block-diagonal classifier weight, lane-padded cols
    b2_ref   : (1, Lpad)
    out_ref  : (Bp, Lpad)
    """
    # --- global average pool over each part's spatial extent (sum; 1/S folded) ---
    pooled = jnp.sum(x_ref[...], axis=-1)                                 # (Bp, C*P)

    # --- all parts' branch Linear as one MXU matmul (bias dropped: cancels in BN) ---
    z = jnp.dot(pooled, w1_ref[...], preferred_element_type=jnp.float32)  # (Bp, P*D)

    b_pad = z.shape[0]
    if b_pad != b_real:
        row = jax.lax.broadcasted_iota(jnp.int32, (b_pad, 1), 0)
        row_mask = (row < b_real).astype(jnp.float32)
        z = z * row_mask                              # padded batch rows -> exactly 0

    # --- BatchNorm1d, training mode (biased batch stats over real rows, eps=1e-5) ---
    inv_b = jnp.float32(1.0 / b_real)
    mu = jnp.sum(z, axis=0, keepdims=True) * inv_b
    diff = z - mu
    if b_pad != b_real:
        diff = diff * row_mask                        # exclude padded rows from var
    var = jnp.sum(diff * diff, axis=0, keepdims=True) * inv_b

    bn = bn_ref[...]                                  # (2, P*D)
    h = bn[0:1, :] * diff * jax.lax.rsqrt(var + 1e-5) + bn[1:2, :]

    # --- Dropout(p): {0,1} keep mask; 1/(1-p) scale already folded into bn ---
    # TODO(synk): in production generate the keep mask in-kernel with
    # pltpu.prng_seed + pltpu.prng_random_bits to drop this input entirely.
    h = h * keep_ref[...]

    # --- all parts' classifier Linear as one block-diagonal, lane-dense matmul ---
    out_ref[...] = jnp.dot(h, w2_ref[...], preferred_element_type=jnp.float32) + b2_ref[...]


def _full_spec(shape):
    # Whole-array block (gridless call), resident in VMEM.
    return pl.BlockSpec(shape, lambda: (0,) * len(shape))


def pack_params(params, spatial_per_part, drop_scale):
    """Fuse per-part PyTorch-layout params into MXU-friendly kernel operands."""
    w1, b1, gamma, beta, w2, b2 = params      # (P,D,C),(P,D),(P,D),(P,D),(P,L,D),(P,L)
    del b1  # Linear bias ahead of batch-stat BatchNorm cancels in (z - mu): no-op.
    P, D, C = w1.shape
    L = w2.shape[1]
    eye = jnp.eye(P, dtype=w1.dtype)

    # Branch weight in interleaved-block layout matching pooled's (B, C*P) rows:
    #   w1_il[c*P + p, p*D + d] = w1[p, d, c] / S   (avg-pool scale folded in)
    w1_il = jnp.einsum('pdc,pq->cpqd', w1, eye).reshape(C * P, P * D)
    w1_il = w1_il * jnp.float32(1.0 / spatial_per_part)

    # BatchNorm affine params coalesced into one operand; dropout scale folded in.
    bn = jnp.concatenate([gamma.reshape(1, P * D),
                          beta.reshape(1, P * D)], axis=0) * jnp.float32(drop_scale)

    # Classifier as a block-diagonal weight, zero-padded to a lane-dense width:
    #   w2_bd[p*D + d, p*L + l] = w2[p, l, d]
    # TODO(synk): gate this zero-inflated fused-weight trick on size; at realistic
    # PCB shapes (C~2048, P=6, D~256) switch to a gridded per-part batched matmul.
    pl_total = P * L
    lpad = max(LANE, -(-pl_total // LANE) * LANE)
    w2_bd = jnp.einsum('pld,pq->pdql', w2, eye).reshape(P * D, pl_total)
    w2_p = jnp.pad(w2_bd, ((0, 0), (0, lpad - pl_total)))
    b2_p = jnp.pad(b2.reshape(1, pl_total), ((0, 0), (0, lpad - pl_total)))
    return w1_il, bn, w2_p, b2_p, lpad


def pcb_forward(x, params, n_parts, keep_mask, drop_p=0.5):
    """x: (B, C, H, W) float32 NCHW. Returns list of n_parts (B, num_labels) logits."""
    B, C, H, W = x.shape
    P = n_parts
    assert H % P == 0
    S = (H // P) * W
    D = params[0].shape[1]
    L = params[4].shape[1]
    PD = P * D

    w1_il, bn, w2_p, b2_p, lpad = pack_params(params, S, 1.0 / (1.0 - drop_p))

    # Transpose-free contiguous view: part p / channel c occupies row c*P + p.
    # TODO(synk): at production sizes pick the view/tile so the minor dim is a
    # multiple of 128 (here S=64 leaves lanes half-filled on the largest operand),
    # and add a grid (batch "parallel") with vmem_limit_bytes for v7x's 64 MiB VMEM.
    x3 = x.reshape(B, C * P, S)

    # Pad batch up to the f32 sublane count: full vregs for BN reductions and an
    # unmasked output store; padded rows masked out of BN stats and sliced off.
    B_pad = -(-B // SUBLANE) * SUBLANE
    keep = keep_mask
    if B_pad != B:
        x3 = jnp.pad(x3, ((0, B_pad - B), (0, 0), (0, 0)))
        keep = jnp.pad(keep_mask, ((0, B_pad - B), (0, 0)))

    operands = (x3, keep, w1_il, bn, w2_p, b2_p)
    flops = (B_pad * C * P * S               # pooling adds
             + 2 * B_pad * (C * P) * PD      # fused branch matmul
             + 2 * B_pad * PD * lpad         # fused classifier matmul
             + 10 * B_pad * PD)              # BN / dropout elementwise
    bytes_accessed = sum(int(a.size) * 4 for a in operands) + B_pad * lpad * 4

    out = pl.pallas_call(
        functools.partial(pcb_kernel, b_real=B),
        out_shape=jax.ShapeDtypeStruct((B_pad, lpad), jnp.float32),
        in_specs=[_full_spec(a.shape) for a in operands],
        out_specs=_full_spec((B_pad, lpad)),
        cost_estimate=pl.CostEstimate(flops=flops, transcendentals=PD,
                                      bytes_accessed=bytes_accessed),
    )(*operands)

    return [out[:B, p * L:(p + 1) * L] for p in range(P)]


def make_keep_mask(key, batch, n_parts, d_per_part, p=0.5):
    """{0,1} dropout keep mask (the 1/(1-p) scale is folded into the BN params)."""
    keep = jax.random.bernoulli(key, 1.0 - p, (batch, n_parts * d_per_part))
    return keep.astype(jnp.float32)


def init_params(key, num_ftrs, feature_dim, n_parts, num_labels):
    D = feature_dim // n_parts
    k1, k2, k3 = jax.random.split(key, 3)
    # branch Linear: kaiming_normal_(a=0, mode='fan_out') -> std = sqrt(2/D), bias 0
    w1 = jax.random.normal(k1, (n_parts, D, num_ftrs), jnp.float32) * jnp.sqrt(2.0 / D)
    b1 = jnp.zeros((n_parts, D), jnp.float32)
    # BatchNorm1d: weight ~ N(1.0, 0.02), bias 0
    gamma = 1.0 + 0.02 * jax.random.normal(k2, (n_parts, D), jnp.float32)
    beta = jnp.zeros((n_parts, D), jnp.float32)
    # classifier Linear: PyTorch default ~ U(-1/sqrt(fan_in), 1/sqrt(fan_in)), bias 0
    bound = 1.0 / jnp.sqrt(jnp.float32(D))
    w2 = jax.random.uniform(k3, (n_parts, num_labels, D), jnp.float32, -bound, bound)
    b2 = jnp.zeros((n_parts, num_labels), jnp.float32)
    return w1, b1, gamma, beta, w2, b2


def pcb_reference(x, params, n_parts, keep_mask, drop_p=0.5):
    """Pure-JAX reference mirroring the PyTorch module (training path)."""
    w1, b1, gamma, beta, w2, b2 = params
    B, C, H, W = x.shape
    P = n_parts
    Hp = H // P
    D = w1.shape[1]
    scale = 1.0 / (1.0 - drop_p)
    outs = []
    for p in range(P):
        xp = x[:, :, p * Hp:(p + 1) * Hp, :]
        pooled = jnp.mean(xp, axis=(2, 3))
        z = pooled @ w1[p].T + b1[p]
        mu = jnp.mean(z, axis=0, keepdims=True)
        var = jnp.mean((z - mu) ** 2, axis=0, keepdims=True)
        h = gamma[p] * (z - mu) / jnp.sqrt(var + 1e-5) + beta[p]
        h = h * keep_mask[:, p * D:(p + 1) * D] * scale
        outs.append(h @ w2[p].T + b2[p])
    return outs


if __name__ == "__main__":
    # small shapes consistent with the module
    num_ftrs, H, W = 64, 16, 16
    n_parts = 4
    feature_dim = 128          # per-part D = 32
    config = {"num_labels": 8}
    D = feature_dim // n_parts

    key = jax.random.PRNGKey(0)
    kparams, kdata = jax.random.split(key)
    params = init_params(kparams, num_ftrs, feature_dim, n_parts, config["num_labels"])

    # B=4 exercises the batch->8 sublane-padding path; B=8 the already-aligned path.
    for B in (4, 8):
        kcase = jax.random.fold_in(kdata, B)
        kx, kd = jax.random.split(kcase)
        x = jax.random.normal(kx, (B, num_ftrs, H, W), jnp.float32)
        keep = make_keep_mask(kd, B, n_parts, D, p=0.5)

        y_split = pcb_forward(x, params, n_parts, keep)
        y_split = [jax.block_until_ready(y) for y in y_split]

        assert len(y_split) == n_parts
        y_ref = pcb_reference(x, params, n_parts, keep)
        for y, yr in zip(y_split, y_ref):
            assert y.shape == (B, config["num_labels"]) and y.dtype == jnp.float32
            assert bool(jnp.all(jnp.isfinite(y)))
            max_diff = float(jnp.max(jnp.abs(y - yr)))
            assert bool(jnp.allclose(y, yr, rtol=1e-4, atol=1e-4)), (
                "max abs diff %f" % max_diff)

    print("KERNEL_OK")
</pallas_src>

<mosaic_0001>
module attributes {stable_mosaic.version = 11 : i64} {
  func.func @pcb_kernel(%arg0: memref<8x256x64xf32, #tpu.memory_space<vmem>>, %arg1: memref<8x128xf32, #tpu.memory_space<vmem>>, %arg2: memref<256x128xf32, #tpu.memory_space<vmem>>, %arg3: memref<2x128xf32, #tpu.memory_space<vmem>>, %arg4: memref<128x128xf32, #tpu.memory_space<vmem>>, %arg5: memref<1x128xf32, #tpu.memory_space<vmem>>, %arg6: memref<8x128xf32, #tpu.memory_space<vmem>>) attributes {dimension_semantics = [], scalar_prefetch = 0 : i64, scratch_operands = 0 : i64, tpu.core_type = #tpu.core_type<tc>} {
    %c0 = arith.constant 0 : index
    %c0_0 = arith.constant 0 : index
    %c0_1 = arith.constant 0 : index
    %0 = vector.load %arg0[%c0, %c0_0, %c0_1] : memref<8x256x64xf32, #tpu.memory_space<vmem>>, vector<8x256x64xf32>
    %cst = arith.constant dense<0.000000e+00> : vector<8x256xf32>
    %1 = vector.multi_reduction <add>, %0, %cst [2] : vector<8x256x64xf32> to vector<8x256xf32>
    %c0_2 = arith.constant 0 : index
    %c0_3 = arith.constant 0 : index
    %2 = vector.load %arg2[%c0_2, %c0_3] : memref<256x128xf32, #tpu.memory_space<vmem>>, vector<256x128xf32>
    %cst_4 = arith.constant dense<0.000000e+00> : vector<8x128xf32>
    %3 = tpu.matmul %1, %2, %cst_4 {dimension_numbers = #tpu.dot_dimension_numbers<[1], [0], [0], [1], [0, 0, 1, 1], [], []>} : vector<8x256xf32>, vector<256x128xf32>, vector<8x128xf32> -> vector<8x128xf32>
    %4 = tpu.iota {dimensions = array<i32: 0>} : vector<8x1xi32>
    %c4_i32 = arith.constant 4 : i32
    %5 = vector.broadcast %c4_i32 : i32 to vector<8x1xi32>
    %6 = arith.cmpi slt, %4, %5 : vector<8x1xi32>
    %7 = arith.extui %6 : vector<8x1xi1> to vector<8x1xi32>
    %8 = arith.sitofp %7 : vector<8x1xi32> to vector<8x1xf32>
    %9 = vector.broadcast %8 : vector<8x1xf32> to vector<8x128xf32>
    %10 = arith.mulf %3, %9 : vector<8x128xf32>
    %cst_5 = arith.constant dense<0.000000e+00> : vector<128xf32>
    %11 = vector.multi_reduction <add>, %10, %cst_5 [0] : vector<8x128xf32> to vector<128xf32>
    %12 = vector.shape_cast %11 : vector<128xf32> to vector<1x128xf32>
    %cst_6 = arith.constant 2.500000e-01 : f32
    %13 = vector.broadcast %cst_6 : f32 to vector<1x128xf32>
    %14 = arith.mulf %12, %13 : vector<1x128xf32>
    %15 = vector.broadcast %14 : vector<1x128xf32> to vector<8x128xf32>
    %16 = arith.subf %10, %15 : vector<8x128xf32>
    %17 = vector.broadcast %8 : vector<8x1xf32> to vector<8x128xf32>
    %18 = arith.mulf %16, %17 : vector<8x128xf32>
    %19 = arith.mulf %18, %18 : vector<8x128xf32>
    %cst_7 = arith.constant dense<0.000000e+00> : vector<128xf32>
    %20 = vector.multi_reduction <add>, %19, %cst_7 [0] : vector<8x128xf32> to vector<128xf32>
    %21 = vector.shape_cast %20 : vector<128xf32> to vector<1x128xf32>
    %cst_8 = arith.constant 2.500000e-01 : f32
    %22 = vector.broadcast %cst_8 : f32 to vector<1x128xf32>
    %23 = arith.mulf %21, %22 : vector<1x128xf32>
    %c0_9 = arith.constant 0 : index
    %c0_10 = arith.constant 0 : index
    %24 = vector.load %arg3[%c0_9, %c0_10] : memref<2x128xf32, #tpu.memory_space<vmem>>, vector<2x128xf32>
    %25 = vector.extract_strided_slice %24 {offsets = [0, 0], sizes = [1, 128], strides = [1, 1]} : vector<2x128xf32> to vector<1x128xf32>
    %26 = vector.broadcast %25 : vector<1x128xf32> to vector<8x128xf32>
    %27 = arith.mulf %26, %18 : vector<8x128xf32>
    %cst_11 = arith.constant 9.99999974E-6 : f32
    %28 = vector.broadcast %cst_11 : f32 to vector<1x128xf32>
    %29 = arith.addf %23, %28 : vector<1x128xf32>
    %30 = math.rsqrt %29 : vector<1x128xf32>
    %31 = vector.broadcast %30 : vector<1x128xf32> to vector<8x128xf32>
    %32 = arith.mulf %27, %31 : vector<8x128xf32>
    %33 = vector.extract_strided_slice %24 {offsets = [1, 0], sizes = [1, 128], strides = [1, 1]} : vector<2x128xf32> to vector<1x128xf32>
    %34 = vector.broadcast %33 : vector<1x128xf32> to vector<8x128xf32>
    %35 = arith.addf %32, %34 : vector<8x128xf32>
    %c0_12 = arith.constant 0 : index
    %c0_13 = arith.constant 0 : index
    %36 = vector.load %arg1[%c0_12, %c0_13] : memref<8x128xf32, #tpu.memory_space<vmem>>, vector<8x128xf32>
    %37 = arith.mulf %35, %36 : vector<8x128xf32>
    %c0_14 = arith.constant 0 : index
    %c0_15 = arith.constant 0 : index
    %38 = vector.load %arg4[%c0_14, %c0_15] : memref<128x128xf32, #tpu.memory_space<vmem>>, vector<128x128xf32>
    %cst_16 = arith.constant dense<0.000000e+00> : vector<8x128xf32>
    %39 = tpu.matmul %37, %38, %cst_16 {dimension_numbers = #tpu.dot_dimension_numbers<[1], [0], [0], [1], [0, 0, 1, 1], [], []>} : vector<8x128xf32>, vector<128x128xf32>, vector<8x128xf32> -> vector<8x128xf32>
    %c0_17 = arith.constant 0 : index
    %c0_18 = arith.constant 0 : index
    %40 = vector.load %arg5[%c0_17, %c0_18] : memref<1x128xf32, #tpu.memory_space<vmem>>, vector<1x128xf32>
    %41 = vector.broadcast %40 : vector<1x128xf32> to vector<8x128xf32>
    %42 = arith.addf %39, %41 : vector<8x128xf32>
    %c0_19 = arith.constant 0 : index
    %c0_20 = arith.constant 0 : index
    %43 = vector.load %arg6[%c0_19, %c0_20] : memref<8x128xf32, #tpu.memory_space<vmem>>, vector<8x128xf32>
    tpu.vector_store %arg6[%c0_19, %c0_20], %42 {strides = array<i32>} : memref<8x128xf32, #tpu.memory_space<vmem>>, vector<8x128xf32>,
    return
  }
}

</mosaic_0001>

<llo_original>
// kernel: tpu_custom_call.1
$region0: #{tpu_custom_call.1}
  #allocation0 [shape = 'u32[]', space=smem, size = 0x4, offset = 0x4, fixed_abs, tag = 'smem constant byte address 0x4 - core index']
  #allocation1 [shape = 'u32[72,128]{1,0:T(1,128)}', space=vmem, size = 0x9000, scoped, tag = 'internal scratch']
  %s0 = inlined_call_operand.vmem [shape: f32[8,256,64], index: 0, kind: input, shape index: {}]
  %s1 = inlined_call_operand.vmem [shape: f32[8,128], index: 1, kind: input, shape index: {}]
  %s2 = inlined_call_operand.vmem [shape: f32[256,128], index: 2, kind: input, shape index: {}]
  %s3 = inlined_call_operand.vmem [shape: f32[2,128], index: 3, kind: input, shape index: {}]
  %s4 = inlined_call_operand.vmem [shape: f32[128,128], index: 4, kind: input, shape index: {}]
  %s5 = inlined_call_operand.vmem [shape: f32[1,128], index: 5, kind: input, shape index: {}]
  %s6 = inlined_call_operand.hbm [shape: f32[8,128], index: 6, kind: output, shape index: {}]
  %s7 = sld [smem:[#allocation0]]
  $region34: #{tpu_custom_call.1} parent=0
    _
  %s9 = ssub.s32 1, %s7
  %s10 = scalar_select 0, %s9, %s7
  $region1: #{tpu_custom_call.1} parent=0
    #allocation2 [shape = 'u8[4096]{0}', space=vmem, size = 0x1000, scoped, tag = 'output window, operand 0, single buffered']
    #allocation3 [shape = 's32[1]{0}', space=sflag, size = 0x4, scoped, tag = 'scoped memory for tpu_custom_call.1']
    %11 = vsyncpa [#allocation3], 0
    // Predicated region
    $region2: #{tpu_custom_call.1} parent=1 // pred_check
      _
    $region3: #{tpu_custom_call.1} parent=1 // pred_check_branch
      %13 = sbr.rel (0) target = $region5
    $region4: #{tpu_custom_call.1} parent=1 // pred_region
      _
    $region5: #{tpu_custom_call.1} parent=1 // pred_fallthru
      _
    // Predicated region
    $region6: #{tpu_custom_call.1} parent=1 // pred_check
      _
    $region7: #{tpu_custom_call.1} parent=1 // pred_check_branch
      %15 = sbr.rel (0) target = $region9
    $region8: #{tpu_custom_call.1} parent=1 // pred_region
      _
    $region9: #{tpu_custom_call.1} parent=1 // pred_fallthru
      _
    // Predicated region
    $region10: #{tpu_custom_call.1} parent=1 // pred_check
      _
    $region11: #{tpu_custom_call.1} parent=1 // pred_check_branch
      %17 = sbr.rel (0) target = $region13
    $region12: #{tpu_custom_call.1} parent=1 // pred_region
      _
    $region13: #{tpu_custom_call.1} parent=1 // pred_fallthru
      _
    // Predicated region
    $region14: #{tpu_custom_call.1} parent=1 // pred_check
      _
    $region15: #{tpu_custom_call.1} parent=1 // pred_check_branch
      %19 = sbr.rel (0) target = $region17
    $region16: #{tpu_custom_call.1} parent=1 // pred_region
      _
    $region17: #{tpu_custom_call.1} parent=1 // pred_fallthru
      _
    // Predicated region
    $region18: #{tpu_custom_call.1} parent=1 // pred_check
      _
    $region19: #{tpu_custom_call.1} parent=1 // pred_check_branch
      %21 = sbr.rel (0) target = $region21
    $region20: #{tpu_custom_call.1} parent=1 // pred_region
      _
    $region21: #{tpu_custom_call.1} parent=1 // pred_fallthru
      _
    // Predicated region
    $region22: #{tpu_custom_call.1} parent=1 // pred_check
      _
    $region23: #{tpu_custom_call.1} parent=1 // pred_check_branch
      %23 = sbr.rel (0) target = $region25
    $region24: #{tpu_custom_call.1} parent=1 // pred_region
      _
    $region25: #{tpu_custom_call.1} parent=1 // pred_fallthru
      _
    %v24 = vld [vmem:[%s0] sm:$0xff]
    %v25 = vld [vmem:[%s0 + $0x8] sm:$0xff]
    %v26 = vld [vmem:[%s0 + $0x10] sm:$0xff]
    %v27 = vld [vmem:[%s0 + $0x18] sm:$0xff]
    %v28 = vld [vmem:[%s0 + $0x20] sm:$0xff]
    %v29 = vld [vmem:[%s0 + $0x28] sm:$0xff]
    %v30 = vld [vmem:[%s0 + $0x30] sm:$0xff]
    %v31 = vld [vmem:[%s0 + $0x38] sm:$0xff]
    %v32 = vld [vmem:[%s0 + $0x40] sm:$0xff]
    %v33 = vld [vmem:[%s0 + $0x48] sm:$0xff]
    %v34 = vld [vmem:[%s0 + $0x50] sm:$0xff]
    %v35 = vld [vmem:[%s0 + $0x58] sm:$0xff]
    %v36 = vld [vmem:[%s0 + $0x60] sm:$0xff]
    %v37 = vld [vmem:[%s0 + $0x68] sm:$0xff]
    %v38 = vld [vmem:[%s0 + $0x70] sm:$0xff]
    %v39 = vld [vmem:[%s0 + $0x78] sm:$0xff]
    %v40 = vld [vmem:[%s0 + $0x80] sm:$0xff]
    %v41 = vld [vmem:[%s0 + $0x88] sm:$0xff]
    %v42 = vld [vmem:[%s0 + $0x90] sm:$0xff]
    %v43 = vld [vmem:[%s0 + $0x98] sm:$0xff]
    %v44 = vld [vmem:[%s0 + $0xa0] sm:$0xff]
    %v45 = vld [vmem:[%s0 + $0xa8] sm:$0xff]
    %v46 = vld [vmem:[%s0 + $0xb0] sm:$0xff]
    %v47 = vld [vmem:[%s0 + $0xb8] sm:$0xff]
    %v48 = vld [vmem:[%s0 + $0xc0] sm:$0xff]
    %v49 = vld [vmem:[%s0 + $0xc8] sm:$0xff]
    %v50 = vld [vmem:[%s0 + $0xd0] sm:$0xff]
    %v51 = vld [vmem:[%s0 + $0xd8] sm:$0xff]
    %v52 = vld [vmem:[%s0 + $0xe0] sm:$0xff]
    %v53 = vld [vmem:[%s0 + $0xe8] sm:$0xff]
    %v54 = vld [vmem:[%s0 + $0xf0] sm:$0xff]
    %v55 = vld [vmem:[%s0 + $0xf8] sm:$0xff]
    %v56 = vld [vmem:[%s0 + $0x100] sm:$0xff]
    %v57 = vld [vmem:[%s0 + $0x108] sm:$0xff]
    %v58 = vld [vmem:[%s0 + $0x110] sm:$0xff]
    %v59 = vld [vmem:[%s0 + $0x118] sm:$0xff]
    %v60 = vld [vmem:[%s0 + $0x120] sm:$0xff]
    %v61 = vld [vmem:[%s0 + $0x128] sm:$0xff]
    %v62 = vld [vmem:[%s0 + $0x130] sm:$0xff]
    %v63 = vld [vmem:[%s0 + $0x138] sm:$0xff]
    %v64 = vld [vmem:[%s0 + $0x140] sm:$0xff]
    %v65 = vld [vmem:[%s0 + $0x148] sm:$0xff]
    %v66 = vld [vmem:[%s0 + $0x150] sm:$0xff]
    %v67 = vld [vmem:[%s0 + $0x158] sm:$0xff]
    %v68 = vld [vmem:[%s0 + $0x160] sm:$0xff]
    %v69 = vld [vmem:[%s0 + $0x168] sm:$0xff]
    %v70 = vld [vmem:[%s0 + $0x170] sm:$0xff]
    %v71 = vld [vmem:[%s0 + $0x178] sm:$0xff]
    %v72 = vld [vmem:[%s0 + $0x180] sm:$0xff]
    %v73 = vld [vmem:[%s0 + $0x188] sm:$0xff]
    %v74 = vld [vmem:[%s0 + $0x190] sm:$0xff]
    %v75 = vld [vmem:[%s0 + $0x198] sm:$0xff]
    %v76 = vld [vmem:[%s0 + $0x1a0] sm:$0xff]
    %v77 = vld [vmem:[%s0 + $0x1a8] sm:$0xff]
    %v78 = vld [vmem:[%s0 + $0x1b0] sm:$0xff]
    %v79 = vld [vmem:[%s0 + $0x1b8] sm:$0xff]
    %v80 = vld [vmem:[%s0 + $0x1c0] sm:$0xff]
    %v81 = vld [vmem:[%s0 + $0x1c8] sm:$0xff]
    %v82 = vld [vmem:[%s0 + $0x1d0] sm:$0xff]
    %v83 = vld [vmem:[%s0 + $0x1d8] sm:$0xff]
    %v84 = vld [vmem:[%s0 + $0x1e0] sm:$0xff]
    %v85 = vld [vmem:[%s0 + $0x1e8] sm:$0xff]
    %v86 = vld [vmem:[%s0 + $0x1f0] sm:$0xff]
    %v87 = vld [vmem:[%s0 + $0x1f8] sm:$0xff]
    %v88 = vld [vmem:[%s0 + $0x200] sm:$0xff]
    %v89 = vld [vmem:[%s0 + $0x208] sm:$0xff]
    %v90 = vld [vmem:[%s0 + $0x210] sm:$0xff]
    %v91 = vld [vmem:[%s0 + $0x218] sm:$0xff]
    %v92 = vld [vmem:[%s0 + $0x220] sm:$0xff]
    %v93 = vld [vmem:[%s0 + $0x228] sm:$0xff]
    %v94 = vld [vmem:[%s0 + $0x230] sm:$0xff]
    %v95 = vld [vmem:[%s0 + $0x238] sm:$0xff]
    %v96 = vld [vmem:[%s0 + $0x240] sm:$0xff]
    %v97 = vld [vmem:[%s0 + $0x248] sm:$0xff]
    %v98 = vld [vmem:[%s0 + $0x250] sm:$0xff]
    %v99 = vld [vmem:[%s0 + $0x258] sm:$0xff]
    %v100 = vld [vmem:[%s0 + $0x260] sm:$0xff]
    %v101 = vld [vmem:[%s0 + $0x268] sm:$0xff]
    %v102 = vld [vmem:[%s0 + $0x270] sm:$0xff]
    %v103 = vld [vmem:[%s0 + $0x278] sm:$0xff]
    %v104 = vld [vmem:[%s0 + $0x280] sm:$0xff]
    %v105 = vld [vmem:[%s0 + $0x288] sm:$0xff]
    %v106 = vld [vmem:[%s0 + $0x290] sm:$0xff]
    %v107 = vld [vmem:[%s0 + $0x298] sm:$0xff]
    %v108 = vld [vmem:[%s0 + $0x2a0] sm:$0xff]
    %v109 = vld [vmem:[%s0 + $0x2a8] sm:$0xff]
    %v110 = vld [vmem:[%s0 + $0x2b0] sm:$0xff]
    %v111 = vld [vmem:[%s0 + $0x2b8] sm:$0xff]
    %v112 = vld [vmem:[%s0 + $0x2c0] sm:$0xff]
    %v113 = vld [vmem:[%s0 + $0x2c8] sm:$0xff]
    %v114 = vld [vmem:[%s0 + $0x2d0] sm:$0xff]
    %v115 = vld [vmem:[%s0 + $0x2d8] sm:$0xff]
    %v116 = vld [vmem:[%s0 + $0x2e0] sm:$0xff]
    %v117 = vld [vmem:[%s0 + $0x2e8] sm:$0xff]
    %v118 = vld [vmem:[%s0 + $0x2f0] sm:$0xff]
    %v119 = vld [vmem:[%s0 + $0x2f8] sm:$0xff]
    %v120 = vld [vmem:[%s0 + $0x300] sm:$0xff]
    %v121 = vld [vmem:[%s0 + $0x308] sm:$0xff]
    %v122 = vld [vmem:[%s0 + $0x310] sm:$0xff]
    %v123 = vld [vmem:[%s0 + $0x318] sm:$0xff]
    %v124 = vld [vmem:[%s0 + $0x320] sm:$0xff]
    %v125 = vld [vmem:[%s0 + $0x328] sm:$0xff]
    %v126 = vld [vmem:[%s0 + $0x330] sm:$0xff]
    %v127 = vld [vmem:[%s0 + $0x338] sm:$0xff]
    %v128 = vld [vmem:[%s0 + $0x340] sm:$0xff]
    %v129 = vld [vmem:[%s0 + $0x348] sm:$0xff]
    %v130 = vld [vmem:[%s0 + $0x350] sm:$0xff]
    %v131 = vld [vmem:[%s0 + $0x358] sm:$0xff]
    %v132 = vld [vmem:[%s0 + $0x360] sm:$0xff]
    %v133 = vld [vmem:[%s0 + $0x368] sm:$0xff]
    %v134 = vld [vmem:[%s0 + $0x370] sm:$0xff]
    %v135 = vld [vmem:[%s0 + $0x378] sm:$0xff]
    %v136 = vld [vmem:[%s0 + $0x380] sm:$0xff]
    %v137 = vld [vmem:[%s0 + $0x388] sm:$0xff]
    %v138 = vld [vmem:[%s0 + $0x390] sm:$0xff]
    %v139 = vld [vmem:[%s0 + $0x398] sm:$0xff]
    %v140 = vld [vmem:[%s0 + $0x3a0] sm:$0xff]
    %v141 = vld [vmem:[%s0 + $0x3a8] sm:$0xff]
    %v142 = vld [vmem:[%s0 + $0x3b0] sm:$0xff]
    %v143 = vld [vmem:[%s0 + $0x3b8] sm:$0xff]
    %v144 = vld [vmem:[%s0 + $0x3c0] sm:$0xff]
    %v145 = vld [vmem:[%s0 + $0x3c8] sm:$0xff]
    %v146 = vld [vmem:[%s0 + $0x3d0] sm:$0xff]
    %v147 = vld [vmem:[%s0 + $0x3d8] sm:$0xff]
    %v148 = vld [vmem:[%s0 + $0x3e0] sm:$0xff]
    %v149 = vld [vmem:[%s0 + $0x3e8] sm:$0xff]
    %v150 = vld [vmem:[%s0 + $0x3f0] sm:$0xff]
    %v151 = vld [vmem:[%s0 + $0x3f8] sm:$0xff]
    %v152 = vld [vmem:[%s0 + $0x400] sm:$0xff]
    %v153 = vld [vmem:[%s0 + $0x408] sm:$0xff]
    %v154 = vld [vmem:[%s0 + $0x410] sm:$0xff]
    %v155 = vld [vmem:[%s0 + $0x418] sm:$0xff]
    %v156 = vld [vmem:[%s0 + $0x420] sm:$0xff]
    %v157 = vld [vmem:[%s0 + $0x428] sm:$0xff]
    %v158 = vld [vmem:[%s0 + $0x430] sm:$0xff]
    %v159 = vld [vmem:[%s0 + $0x438] sm:$0xff]
    %v160 = vld [vmem:[%s0 + $0x440] sm:$0xff]
    %v161 = vld [vmem:[%s0 + $0x448] sm:$0xff]
    %v162 = vld [vmem:[%s0 + $0x450] sm:$0xff]
    %v163 = vld [vmem:[%s0 + $0x458] sm:$0xff]
    %v164 = vld [vmem:[%s0 + $0x460] sm:$0xff]
    %v165 = vld [vmem:[%s0 + $0x468] sm:$0xff]
    %v166 = vld [vmem:[%s0 + $0x470] sm:$0xff]
    %v167 = vld [vmem:[%s0 + $0x478] sm:$0xff]
    %v168 = vld [vmem:[%s0 + $0x480] sm:$0xff]
    %v169 = vld [vmem:[%s0 + $0x488] sm:$0xff]
    %v170 = vld [vmem:[%s0 + $0x490] sm:$0xff]
    %v171 = vld [vmem:[%s0 + $0x498] sm:$0xff]
    %v172 = vld [vmem:[%s0 + $0x4a0] sm:$0xff]
    %v173 = vld [vmem:[%s0 + $0x4a8] sm:$0xff]
    %v174 = vld [vmem:[%s0 + $0x4b0] sm:$0xff]
    %v175 = vld [vmem:[%s0 + $0x4b8] sm:$0xff]
    %v176 = vld [vmem:[%s0 + $0x4c0] sm:$0xff]
    %v177 = vld [vmem:[%s0 + $0x4c8] sm:$0xff]
    %v178 = vld [vmem:[%s0 + $0x4d0] sm:$0xff]
    %v179 = vld [vmem:[%s0 + $0x4d8] sm:$0xff]
    %v180 = vld [vmem:[%s0 + $0x4e0] sm:$0xff]
    %v181 = vld [vmem:[%s0 + $0x4e8] sm:$0xff]
    %v182 = vld [vmem:[%s0 + $0x4f0] sm:$0xff]
    %v183 = vld [vmem:[%s0 + $0x4f8] sm:$0xff]
    %v184 = vld [vmem:[%s0 + $0x500] sm:$0xff]
    %v185 = vld [vmem:[%s0 + $0x508] sm:$0xff]
    %v186 = vld [vmem:[%s0 + $0x510] sm:$0xff]
    %v187 = vld [vmem:[%s0 + $0x518] sm:$0xff]
    %v188 = vld [vmem:[%s0 + $0x520] sm:$0xff]
    %v189 = vld [vmem:[%s0 + $0x528] sm:$0xff]
    %v190 = vld [vmem:[%s0 + $0x530] sm:$0xff]
    %v191 = vld [vmem:[%s0 + $0x538] sm:$0xff]
    %v192 = vld [vmem:[%s0 + $0x540] sm:$0xff]
    %v193 = vld [vmem:[%s0 + $0x548] sm:$0xff]
    %v194 = vld [vmem:[%s0 + $0x550] sm:$0xff]
    %v195 = vld [vmem:[%s0 + $0x558] sm:$0xff]
    %v196 = vld [vmem:[%s0 + $0x560] sm:$0xff]
    %v197 = vld [vmem:[%s0 + $0x568] sm:$0xff]
    %v198 = vld [vmem:[%s0 + $0x570] sm:$0xff]
    %v199 = vld [vmem:[%s0 + $0x578] sm:$0xff]
    %v200 = vld [vmem:[%s0 + $0x580] sm:$0xff]
    %v201 = vld [vmem:[%s0 + $0x588] sm:$0xff]
    %v202 = vld [vmem:[%s0 + $0x590] sm:$0xff]
    %v203 = vld [vmem:[%s0 + $0x598] sm:$0xff]
    %v204 = vld [vmem:[%s0 + $0x5a0] sm:$0xff]
    %v205 = vld [vmem:[%s0 + $0x5a8] sm:$0xff]
    %v206 = vld [vmem:[%s0 + $0x5b0] sm:$0xff]
    %v207 = vld [vmem:[%s0 + $0x5b8] sm:$0xff]
    %v208 = vld [vmem:[%s0 + $0x5c0] sm:$0xff]
    %v209 = vld [vmem:[%s0 + $0x5c8] sm:$0xff]
    %v210 = vld [vmem:[%s0 + $0x5d0] sm:$0xff]
    %v211 = vld [vmem:[%s0 + $0x5d8] sm:$0xff]
    %v212 = vld [vmem:[%s0 + $0x5e0] sm:$0xff]
    %v213 = vld [vmem:[%s0 + $0x5e8] sm:$0xff]
    %v214 = vld [vmem:[%s0 + $0x5f0] sm:$0xff]
    %v215 = vld [vmem:[%s0 + $0x5f8] sm:$0xff]
    %v216 = vld [vmem:[%s0 + $0x600] sm:$0xff]
    %v217 = vld [vmem:[%s0 + $0x608] sm:$0xff]
    %v218 = vld [vmem:[%s0 + $0x610] sm:$0xff]
    %v219 = vld [vmem:[%s0 + $0x618] sm:$0xff]
    %v220 = vld [vmem:[%s0 + $0x620] sm:$0xff]
    %v221 = vld [vmem:[%s0 + $0x628] sm:$0xff]
    %v222 = vld [vmem:[%s0 + $0x630] sm:$0xff]
    %v223 = vld [vmem:[%s0 + $0x638] sm:$0xff]
    %v224 = vld [vmem:[%s0 + $0x640] sm:$0xff]
    %v225 = vld [vmem:[%s0 + $0x648] sm:$0xff]
    %v226 = vld [vmem:[%s0 + $0x650] sm:$0xff]
    %v227 = vld [vmem:[%s0 + $0x658] sm:$0xff]
    %v228 = vld [vmem:[%s0 + $0x660] sm:$0xff]
    %v229 = vld [vmem:[%s0 + $0x668] sm:$0xff]
    %v230 = vld [vmem:[%s0 + $0x670] sm:$0xff]
    %v231 = vld [vmem:[%s0 + $0x678] sm:$0xff]
    %v232 = vld [vmem:[%s0 + $0x680] sm:$0xff]
    %v233 = vld [vmem:[%s0 + $0x688] sm:$0xff]
    %v234 = vld [vmem:[%s0 + $0x690] sm:$0xff]
    %v235 = vld [vmem:[%s0 + $0x698] sm:$0xff]
    %v236 = vld [vmem:[%s0 + $0x6a0] sm:$0xff]
    %v237 = vld [vmem:[%s0 + $0x6a8] sm:$0xff]
    %v238 = vld [vmem:[%s0 + $0x6b0] sm:$0xff]
    %v239 = vld [vmem:[%s0 + $0x6b8] sm:$0xff]
    %v240 = vld [vmem:[%s0 + $0x6c0] sm:$0xff]
    %v241 = vld [vmem:[%s0 + $0x6c8] sm:$0xff]
    %v242 = vld [vmem:[%s0 + $0x6d0] sm:$0xff]
    %v243 = vld [vmem:[%s0 + $0x6d8] sm:$0xff]
    %v244 = vld [vmem:[%s0 + $0x6e0] sm:$0xff]
    %v245 = vld [vmem:[%s0 + $0x6e8] sm:$0xff]
    %v246 = vld [vmem:[%s0 + $0x6f0] sm:$0xff]
    %v247 = vld [vmem:[%s0 + $0x6f8] sm:$0xff]
    %v248 = vld [vmem:[%s0 + $0x700] sm:$0xff]
    %v249 = vld [vmem:[%s0 + $0x708] sm:$0xff]
    %v250 = vld [vmem:[%s0 + $0x710] sm:$0xff]
    %v251 = vld [vmem:[%s0 + $0x718] sm:$0xff]
    %v252 = vld [vmem:[%s0 + $0x720] sm:$0xff]
    %v253 = vld [vmem:[%s0 + $0x728] sm:$0xff]
    %v254 = vld [vmem:[%s0 + $0x730] sm:$0xff]
    %v255 = vld [vmem:[%s0 + $0x738] sm:$0xff]
    %v256 = vld [vmem:[%s0 + $0x740] sm:$0xff]
    %v257 = vld [vmem:[%s0 + $0x748] sm:$0xff]
    %v258 = vld [vmem:[%s0 + $0x750] sm:$0xff]
    %v259 = vld [vmem:[%s0 + $0x758] sm:$0xff]
    %v260 = vld [vmem:[%s0 + $0x760] sm:$0xff]
    %v261 = vld [vmem:[%s0 + $0x768] sm:$0xff]
    %v262 = vld [vmem:[%s0 + $0x770] sm:$0xff]
    %v263 = vld [vmem:[%s0 + $0x778] sm:$0xff]
    %v264 = vld [vmem:[%s0 + $0x780] sm:$0xff]
    %v265 = vld [vmem:[%s0 + $0x788] sm:$0xff]
    %v266 = vld [vmem:[%s0 + $0x790] sm:$0xff]
    %v267 = vld [vmem:[%s0 + $0x798] sm:$0xff]
    %v268 = vld [vmem:[%s0 + $0x7a0] sm:$0xff]
    %v269 = vld [vmem:[%s0 + $0x7a8] sm:$0xff]
    %v270 = vld [vmem:[%s0 + $0x7b0] sm:$0xff]
    %v271 = vld [vmem:[%s0 + $0x7b8] sm:$0xff]
    %v272 = vld [vmem:[%s0 + $0x7c0] sm:$0xff]
    %v273 = vld [vmem:[%s0 + $0x7c8] sm:$0xff]
    %v274 = vld [vmem:[%s0 + $0x7d0] sm:$0xff]
    %v275 = vld [vmem:[%s0 + $0x7d8] sm:$0xff]
    %v276 = vld [vmem:[%s0 + $0x7e0] sm:$0xff]
    %v277 = vld [vmem:[%s0 + $0x7e8] sm:$0xff]
    %v278 = vld [vmem:[%s0 + $0x7f0] sm:$0xff]
    %v279 = vld [vmem:[%s0 + $0x7f8] sm:$0xff]
    %vm280 = vcmask 523264
    %v281 = vsel %vm280, %v24, 0.0
    %282 = vadd.xlane.f32.xlu0 %v281
    %v283 = vpop.xlane.xlu0 %282
    %v284 = vsel %vm280, %v25, 0.0
    %285 = vadd.xlane.f32.xlu0 %v284
    %v286 = vpop.xlane.xlu0 %285
    %v287 = vsel %vm280, %v26, 0.0
    %288 = vadd.xlane.f32.xlu0 %v287
    %v289 = vpop.xlane.xlu0 %288
    %v290 = vsel %vm280, %v27, 0.0
    %291 = vadd.xlane.f32.xlu0 %v290
    %v292 = vpop.xlane.xlu0 %291
    %v293 = vsel %vm280, %v28, 0.0
    %294 = vadd.xlane.f32.xlu0 %v293
    %v295 = vpop.xlane.xlu0 %294
    %v296 = vsel %vm280, %v29, 0.0
    %297 = vadd.xlane.f32.xlu0 %v296
    %v298 = vpop.xlane.xlu0 %297
    %v299 = vsel %vm280, %v30, 0.0
    %300 = vadd.xlane.f32.xlu0 %v299
    %v301 = vpop.xlane.xlu0 %300
    %v302 = vsel %vm280, %v31, 0.0
    %303 = vadd.xlane.f32.xlu0 %v302
    %v304 = vpop.xlane.xlu0 %303
    %v305 = vsel %vm280, %v32, 0.0
    %306 = vadd.xlane.f32.xlu0 %v305
    %v307 = vpop.xlane.xlu0 %306
    %v308 = vsel %vm280, %v33, 0.0
    %309 = vadd.xlane.f32.xlu0 %v308
    %v310 = vpop.xlane.xlu0 %309
    %v311 = vsel %vm280, %v34, 0.0
    %312 = vadd.xlane.f32.xlu0 %v311
    %v313 = vpop.xlane.xlu0 %312
    %v314 = vsel %vm280, %v35, 0.0
    %315 = vadd.xlane.f32.xlu0 %v314
    %v316 = vpop.xlane.xlu0 %315
    %v317 = vsel %vm280, %v36, 0.0
    %318 = vadd.xlane.f32.xlu0 %v317
    %v319 = vpop.xlane.xlu0 %318
    %v320 = vsel %vm280, %v37, 0.0
    %321 = vadd.xlane.f32.xlu0 %v320
    %v322 = vpop.xlane.xlu0 %321
    %v323 = vsel %vm280, %v38, 0.0
    %324 = vadd.xlane.f32.xlu0 %v323
    %v325 = vpop.xlane.xlu0 %324
    %v326 = vsel %vm280, %v39, 0.0
    %327 = vadd.xlane.f32.xlu0 %v326
    %v328 = vpop.xlane.xlu0 %327
    %v329 = vsel %vm280, %v40, 0.0
    %330 = vadd.xlane.f32.xlu0 %v329
    %v331 = vpop.xlane.xlu0 %330
    %v332 = vsel %vm280, %v41, 0.0
    %333 = vadd.xlane.f32.xlu0 %v332
    %v334 = vpop.xlane.xlu0 %333
    %v335 = vsel %vm280, %v42, 0.0
    %336 = vadd.xlane.f32.xlu0 %v335
    %v337 = vpop.xlane.xlu0 %336
    %v338 = vsel %vm280, %v43, 0.0
    %339 = vadd.xlane.f32.xlu0 %v338
    %v340 = vpop.xlane.xlu0 %339
    %v341 = vsel %vm280, %v44, 0.0
    %342 = vadd.xlane.f32.xlu0 %v341
    %v343 = vpop.xlane.xlu0 %342
    %v344 = vsel %vm280, %v45, 0.0
    %345 = vadd.xlane.f32.xlu0 %v344
    %v346 = vpop.xlane.xlu0 %345
    %v347 = vsel %vm280, %v46, 0.0
    %348 = vadd.xlane.f32.xlu0 %v347
    %v349 = vpop.xlane.xlu0 %348
    %v350 = vsel %vm280, %v47, 0.0
    %351 = vadd.xlane.f32.xlu0 %v350
    %v352 = vpop.xlane.xlu0 %351
    %v353 = vsel %vm280, %v48, 0.0
    %354 = vadd.xlane.f32.xlu0 %v353
    %v355 = vpop.xlane.xlu0 %354
    %v356 = vsel %vm280, %v49, 0.0
    %357 = vadd.xlane.f32.xlu0 %v356
    %v358 = vpop.xlane.xlu0 %357
    %v359 = vsel %vm280, %v50, 0.0
    %360 = vadd.xlane.f32.xlu0 %v359
    %v361 = vpop.xlane.xlu0 %360
    %v362 = vsel %vm280, %v51, 0.0
    %363 = vadd.xlane.f32.xlu0 %v362
    %v364 = vpop.xlane.xlu0 %363
    %v365 = vsel %vm280, %v52, 0.0
    %366 = vadd.xlane.f32.xlu0 %v365
    %v367 = vpop.xlane.xlu0 %366
    %v368 = vsel %vm280, %v53, 0.0
    %369 = vadd.xlane.f32.xlu0 %v368
    %v370 = vpop.xlane.xlu0 %369
    %v371 = vsel %vm280, %v54, 0.0
    %372 = vadd.xlane.f32.xlu0 %v371
    %v373 = vpop.xlane.xlu0 %372
    %v374 = vsel %vm280, %v55, 0.0
    %375 = vadd.xlane.f32.xlu0 %v374
    %v376 = vpop.xlane.xlu0 %375
    %v377 = vsel %vm280, %v56, 0.0
    %378 = vadd.xlane.f32.xlu0 %v377
    %v379 = vpop.xlane.xlu0 %378
    %v380 = vsel %vm280, %v57, 0.0
    %381 = vadd.xlane.f32.xlu0 %v380
    %v382 = vpop.xlane.xlu0 %381
    %v383 = vsel %vm280, %v58, 0.0
    %384 = vadd.xlane.f32.xlu0 %v383
    %v385 = vpop.xlane.xlu0 %384
    %v386 = vsel %vm280, %v59, 0.0
    %387 = vadd.xlane.f32.xlu0 %v386
    %v388 = vpop.xlane.xlu0 %387
    %v389 = vsel %vm280, %v60, 0.0
    %390 = vadd.xlane.f32.xlu0 %v389
    %v391 = vpop.xlane.xlu0 %390
    %v392 = vsel %vm280, %v61, 0.0
    %393 = vadd.xlane.f32.xlu0 %v392
    %v394 = vpop.xlane.xlu0 %393
    %v395 = vsel %vm280, %v62, 0.0
    %396 = vadd.xlane.f32.xlu0 %v395
    %v397 = vpop.xlane.xlu0 %396
    %v398 = vsel %vm280, %v63, 0.0
    %399 = vadd.xlane.f32.xlu0 %v398
    %v400 = vpop.xlane.xlu0 %399
    %v401 = vsel %vm280, %v64, 0.0
    %402 = vadd.xlane.f32.xlu0 %v401
    %v403 = vpop.xlane.xlu0 %402
    %v404 = vsel %vm280, %v65, 0.0
    %405 = vadd.xlane.f32.xlu0 %v404
    %v406 = vpop.xlane.xlu0 %405
    %v407 = vsel %vm280, %v66, 0.0
    %408 = vadd.xlane.f32.xlu0 %v407
    %v409 = vpop.xlane.xlu0 %408
    %v410 = vsel %vm280, %v67, 0.0
    %411 = vadd.xlane.f32.xlu0 %v410
    %v412 = vpop.xlane.xlu0 %411
    %v413 = vsel %vm280, %v68, 0.0
    %414 = vadd.xlane.f32.xlu0 %v413
    %v415 = vpop.xlane.xlu0 %414
    %v416 = vsel %vm280, %v69, 0.0
    %417 = vadd.xlane.f32.xlu0 %v416
    %v418 = vpop.xlane.xlu0 %417
    %v419 = vsel %vm280, %v70, 0.0
    %420 = vadd.xlane.f32.xlu0 %v419
    %v421 = vpop.xlane.xlu0 %420
    %v422 = vsel %vm280, %v71, 0.0
    %423 = vadd.xlane.f32.xlu0 %v422
    %v424 = vpop.xlane.xlu0 %423
    %v425 = vsel %vm280, %v72, 0.0
    %426 = vadd.xlane.f32.xlu0 %v425
    %v427 = vpop.xlane.xlu0 %426
    %v428 = vsel %vm280, %v73, 0.0
    %429 = vadd.xlane.f32.xlu0 %v428
    %v430 = vpop.xlane.xlu0 %429
    %v431 = vsel %vm280, %v74, 0.0
    %432 = vadd.xlane.f32.xlu0 %v431
    %v433 = vpop.xlane.xlu0 %432
    %v434 = vsel %vm280, %v75, 0.0
    %435 = vadd.xlane.f32.xlu0 %v434
    %v436 = vpop.xlane.xlu0 %435
    %v437 = vsel %vm280, %v76, 0.0
    %438 = vadd.xlane.f32.xlu0 %v437
    %v439 = vpop.xlane.xlu0 %438
    %v440 = vsel %vm280, %v77, 0.0
    %441 = vadd.xlane.f32.xlu0 %v440
    %v442 = vpop.xlane.xlu0 %441
    %v443 = vsel %vm280, %v78, 0.0
    %444 = vadd.xlane.f32.xlu0 %v443
    %v445 = vpop.xlane.xlu0 %444
    %v446 = vsel %vm280, %v79, 0.0
    %447 = vadd.xlane.f32.xlu0 %v446
    %v448 = vpop.xlane.xlu0 %447
    %v449 = vsel %vm280, %v80, 0.0
    %450 = vadd.xlane.f32.xlu0 %v449
    %v451 = vpop.xlane.xlu0 %450
    %v452 = vsel %vm280, %v81, 0.0
    %453 = vadd.xlane.f32.xlu0 %v452
    %v454 = vpop.xlane.xlu0 %453
    %v455 = vsel %vm280, %v82, 0.0
    %456 = vadd.xlane.f32.xlu0 %v455
    %v457 = vpop.xlane.xlu0 %456
    %v458 = vsel %vm280, %v83, 0.0
    %459 = vadd.xlane.f32.xlu0 %v458
    %v460 = vpop.xlane.xlu0 %459
    %v461 = vsel %vm280, %v84, 0.0
    %462 = vadd.xlane.f32.xlu0 %v461
    %v463 = vpop.xlane.xlu0 %462
    %v464 = vsel %vm280, %v85, 0.0
    %465 = vadd.xlane.f32.xlu0 %v464
    %v466 = vpop.xlane.xlu0 %465
    %v467 = vsel %vm280, %v86, 0.0
    %468 = vadd.xlane.f32.xlu0 %v467
    %v469 = vpop.xlane.xlu0 %468
    %v470 = vsel %vm280, %v87, 0.0
    %471 = vadd.xlane.f32.xlu0 %v470
    %v472 = vpop.xlane.xlu0 %471
    %v473 = vsel %vm280, %v88, 0.0
    %474 = vadd.xlane.f32.xlu0 %v473
    %v475 = vpop.xlane.xlu0 %474
    %v476 = vsel %vm280, %v89, 0.0
    %477 = vadd.xlane.f32.xlu0 %v476
    %v478 = vpop.xlane.xlu0 %477
    %v479 = vsel %vm280, %v90, 0.0
    %480 = vadd.xlane.f32.xlu0 %v479
    %v481 = vpop.xlane.xlu0 %480
    %v482 = vsel %vm280, %v91, 0.0
    %483 = vadd.xlane.f32.xlu0 %v482
    %v484 = vpop.xlane.xlu0 %483
    %v485 = vsel %vm280, %v92, 0.0
    %486 = vadd.xlane.f32.xlu0 %v485
    %v487 = vpop.xlane.xlu0 %486
    %v488 = vsel %vm280, %v93, 0.0
    %489 = vadd.xlane.f32.xlu0 %v488
    %v490 = vpop.xlane.xlu0 %489
    %v491 = vsel %vm280, %v94, 0.0
    %492 = vadd.xlane.f32.xlu0 %v491
    %v493 = vpop.xlane.xlu0 %492
    %v494 = vsel %vm280, %v95, 0.0
    %495 = vadd.xlane.f32.xlu0 %v494
    %v496 = vpop.xlane.xlu0 %495
    %v497 = vsel %vm280, %v96, 0.0
    %498 = vadd.xlane.f32.xlu0 %v497
    %v499 = vpop.xlane.xlu0 %498
    %v500 = vsel %vm280, %v97, 0.0
    %501 = vadd.xlane.f32.xlu0 %v500
    %v502 = vpop.xlane.xlu0 %501
    %v503 = vsel %vm280, %v98, 0.0
    %504 = vadd.xlane.f32.xlu0 %v503
    %v505 = vpop.xlane.xlu0 %504
    %v506 = vsel %vm280, %v99, 0.0
    %507 = vadd.xlane.f32.xlu0 %v506
    %v508 = vpop.xlane.xlu0 %507
    %v509 = vsel %vm280, %v100, 0.0
    %510 = vadd.xlane.f32.xlu0 %v509
    %v511 = vpop.xlane.xlu0 %510
    %v512 = vsel %vm280, %v101, 0.0
    %513 = vadd.xlane.f32.xlu0 %v512
    %v514 = vpop.xlane.xlu0 %513
    %v515 = vsel %vm280, %v102, 0.0
    %516 = vadd.xlane.f32.xlu0 %v515
    %v517 = vpop.xlane.xlu0 %516
    %v518 = vsel %vm280, %v103, 0.0
    %519 = vadd.xlane.f32.xlu0 %v518
    %v520 = vpop.xlane.xlu0 %519
    %v521 = vsel %vm280, %v104, 0.0
    %522 = vadd.xlane.f32.xlu0 %v521
    %v523 = vpop.xlane.xlu0 %522
    %v524 = vsel %vm280, %v105, 0.0
    %525 = vadd.xlane.f32.xlu0 %v524
    %v526 = vpop.xlane.xlu0 %525
    %v527 = vsel %vm280, %v106, 0.0
    %528 = vadd.xlane.f32.xlu0 %v527
    %v529 = vpop.xlane.xlu0 %528
    %v530 = vsel %vm280, %v107, 0.0
    %531 = vadd.xlane.f32.xlu0 %v530
    %v532 = vpop.xlane.xlu0 %531
    %v533 = vsel %vm280, %v108, 0.0
    %534 = vadd.xlane.f32.xlu0 %v533
    %v535 = vpop.xlane.xlu0 %534
    %v536 = vsel %vm280, %v109, 0.0
    %537 = vadd.xlane.f32.xlu0 %v536
    %v538 = vpop.xlane.xlu0 %537
    %v539 = vsel %vm280, %v110, 0.0
    %540 = vadd.xlane.f32.xlu0 %v539
    %v541 = vpop.xlane.xlu0 %540
    %v542 = vsel %vm280, %v111, 0.0
    %543 = vadd.xlane.f32.xlu0 %v542
    %v544 = vpop.xlane.xlu0 %543
    %v545 = vsel %vm280, %v112, 0.0
    %546 = vadd.xlane.f32.xlu0 %v545
    %v547 = vpop.xlane.xlu0 %546
    %v548 = vsel %vm280, %v113, 0.0
    %549 = vadd.xlane.f32.xlu0 %v548
    %v550 = vpop.xlane.xlu0 %549
    %v551 = vsel %vm280, %v114, 0.0
    %552 = vadd.xlane.f32.xlu0 %v551
    %v553 = vpop.xlane.xlu0 %552
    %v554 = vsel %vm280, %v115, 0.0
    %555 = vadd.xlane.f32.xlu0 %v554
    %v556 = vpop.xlane.xlu0 %555
    %v557 = vsel %vm280, %v116, 0.0
    %558 = vadd.xlane.f32.xlu0 %v557
    %v559 = vpop.xlane.xlu0 %558
    %v560 = vsel %vm280, %v117, 0.0
    %561 = vadd.xlane.f32.xlu0 %v560
    %v562 = vpop.xlane.xlu0 %561
    %v563 = vsel %vm280, %v118, 0.0
    %564 = vadd.xlane.f32.xlu0 %v563
    %v565 = vpop.xlane.xlu0 %564
    %v566 = vsel %vm280, %v119, 0.0
    %567 = vadd.xlane.f32.xlu0 %v566
    %v568 = vpop.xlane.xlu0 %567
    %v569 = vsel %vm280, %v120, 0.0
    %570 = vadd.xlane.f32.xlu0 %v569
    %v571 = vpop.xlane.xlu0 %570
    %v572 = vsel %vm280, %v121, 0.0
    %573 = vadd.xlane.f32.xlu0 %v572
    %v574 = vpop.xlane.xlu0 %573
    %v575 = vsel %vm280, %v122, 0.0
    %576 = vadd.xlane.f32.xlu0 %v575
    %v577 = vpop.xlane.xlu0 %576
    %v578 = vsel %vm280, %v123, 0.0
    %579 = vadd.xlane.f32.xlu0 %v578
    %v580 = vpop.xlane.xlu0 %579
    %v581 = vsel %vm280, %v124, 0.0
    %582 = vadd.xlane.f32.xlu0 %v581
    %v583 = vpop.xlane.xlu0 %582
    %v584 = vsel %vm280, %v125, 0.0
    %585 = vadd.xlane.f32.xlu0 %v584
    %v586 = vpop.xlane.xlu0 %585
    %v587 = vsel %vm280, %v126, 0.0
    %588 = vadd.xlane.f32.xlu0 %v587
    %v589 = vpop.xlane.xlu0 %588
    %v590 = vsel %vm280, %v127, 0.0
    %591 = vadd.xlane.f32.xlu0 %v590
    %v592 = vpop.xlane.xlu0 %591
    %v593 = vsel %vm280, %v128, 0.0
    %594 = vadd.xlane.f32.xlu0 %v593
    %v595 = vpop.xlane.xlu0 %594
    %v596 = vsel %vm280, %v129, 0.0
    %597 = vadd.xlane.f32.xlu0 %v596
    %v598 = vpop.xlane.xlu0 %597
    %v599 = vsel %vm280, %v130, 0.0
    %600 = vadd.xlane.f32.xlu0 %v599
    %v601 = vpop.xlane.xlu0 %600
    %v602 = vsel %vm280, %v131, 0.0
    %603 = vadd.xlane.f32.xlu0 %v602
    %v604 = vpop.xlane.xlu0 %603
    %v605 = vsel %vm280, %v132, 0.0
    %606 = vadd.xlane.f32.xlu0 %v605
    %v607 = vpop.xlane.xlu0 %606
    %v608 = vsel %vm280, %v133, 0.0
    %609 = vadd.xlane.f32.xlu0 %v608
    %v610 = vpop.xlane.xlu0 %609
    %v611 = vsel %vm280, %v134, 0.0
    %612 = vadd.xlane.f32.xlu0 %v611
    %v613 = vpop.xlane.xlu0 %612
    %v614 = vsel %vm280, %v135, 0.0
    %615 = vadd.xlane.f32.xlu0 %v614
    %v616 = vpop.xlane.xlu0 %615
    %v617 = vsel %vm280, %v136, 0.0
    %618 = vadd.xlane.f32.xlu0 %v617
    %v619 = vpop.xlane.xlu0 %618
    %v620 = vsel %vm280, %v137, 0.0
    %621 = vadd.xlane.f32.xlu0 %v620
    %v622 = vpop.xlane.xlu0 %621
    %v623 = vsel %vm280, %v138, 0.0
    %624 = vadd.xlane.f32.xlu0 %v623
    %v625 = vpop.xlane.xlu0 %624
    %v626 = vsel %vm280, %v139, 0.0
    %627 = vadd.xlane.f32.xlu0 %v626
    %v628 = vpop.xlane.xlu0 %627
    %v629 = vsel %vm280, %v140, 0.0
    %630 = vadd.xlane.f32.xlu0 %v629
    %v631 = vpop.xlane.xlu0 %630
    %v632 = vsel %vm280, %v141, 0.0
    %633 = vadd.xlane.f32.xlu0 %v632
    %v634 = vpop.xlane.xlu0 %633
    %v635 = vsel %vm280, %v142, 0.0
    %636 = vadd.xlane.f32.xlu0 %v635
    %v637 = vpop.xlane.xlu0 %636
    %v638 = vsel %vm280, %v143, 0.0
    %639 = vadd.xlane.f32.xlu0 %v638
    %v640 = vpop.xlane.xlu0 %639
    %v641 = vsel %vm280, %v144, 0.0
    %642 = vadd.xlane.f32.xlu0 %v641
    %v643 = vpop.xlane.xlu0 %642
    %v644 = vsel %vm280, %v145, 0.0
    %645 = vadd.xlane.f32.xlu0 %v644
    %v646 = vpop.xlane.xlu0 %645
    %v647 = vsel %vm280, %v146, 0.0
    %648 = vadd.xlane.f32.xlu0 %v647
    %v649 = vpop.xlane.xlu0 %648
    %v650 = vsel %vm280, %v147, 0.0
    %651 = vadd.xlane.f32.xlu0 %v650
    %v652 = vpop.xlane.xlu0 %651
    %v653 = vsel %vm280, %v148, 0.0
    %654 = vadd.xlane.f32.xlu0 %v653
    %v655 = vpop.xlane.xlu0 %654
    %v656 = vsel %vm280, %v149, 0.0
    %657 = vadd.xlane.f32.xlu0 %v656
    %v658 = vpop.xlane.xlu0 %657
    %v659 = vsel %vm280, %v150, 0.0
    %660 = vadd.xlane.f32.xlu0 %v659
    %v661 = vpop.xlane.xlu0 %660
    %v662 = vsel %vm280, %v151, 0.0
    %663 = vadd.xlane.f32.xlu0 %v662
    %v664 = vpop.xlane.xlu0 %663
    %v665 = vsel %vm280, %v152, 0.0
    %666 = vadd.xlane.f32.xlu0 %v665
    %v667 = vpop.xlane.xlu0 %666
    %v668 = vsel %vm280, %v153, 0.0
    %669 = vadd.xlane.f32.xlu0 %v668
    %v670 = vpop.xlane.xlu0 %669
    %v671 = vsel %vm280, %v154, 0.0
    %672 = vadd.xlane.f32.xlu0 %v671
    %v673 = vpop.xlane.xlu0 %672
    %v674 = vsel %vm280, %v155, 0.0
    %675 = vadd.xlane.f32.xlu0 %v674
    %v676 = vpop.xlane.xlu0 %675
    %v677 = vsel %vm280, %v156, 0.0
    %678 = vadd.xlane.f32.xlu0 %v677
    %v679 = vpop.xlane.xlu0 %678
    %v680 = vsel %vm280, %v157, 0.0
    %681 = vadd.xlane.f32.xlu0 %v680
    %v682 = vpop.xlane.xlu0 %681
    %v683 = vsel %vm280, %v158, 0.0
    %684 = vadd.xlane.f32.xlu0 %v683
    %v685 = vpop.xlane.xlu0 %684
    %v686 = vsel %vm280, %v159, 0.0
    %687 = vadd.xlane.f32.xlu0 %v686
    %v688 = vpop.xlane.xlu0 %687
    %v689 = vsel %vm280, %v160, 0.0
    %690 = vadd.xlane.f32.xlu0 %v689
    %v691 = vpop.xlane.xlu0 %690
    %v692 = vsel %vm280, %v161, 0.0
    %693 = vadd.xlane.f32.xlu0 %v692
    %v694 = vpop.xlane.xlu0 %693
    %v695 = vsel %vm280, %v162, 0.0
    %696 = vadd.xlane.f32.xlu0 %v695
    %v697 = vpop.xlane.xlu0 %696
    %v698 = vsel %vm280, %v163, 0.0
    %699 = vadd.xlane.f32.xlu0 %v698
    %v700 = vpop.xlane.xlu0 %699
    %v701 = vsel %vm280, %v164, 0.0
    %702 = vadd.xlane.f32.xlu0 %v701
    %v703 = vpop.xlane.xlu0 %702
    %v704 = vsel %vm280, %v165, 0.0
    %705 = vadd.xlane.f32.xlu0 %v704
    %v706 = vpop.xlane.xlu0 %705
    %v707 = vsel %vm280, %v166, 0.0
    %708 = vadd.xlane.f32.xlu0 %v707
    %v709 = vpop.xlane.xlu0 %708
    %v710 = vsel %vm280, %v167, 0.0
    %711 = vadd.xlane.f32.xlu0 %v710
    %v712 = vpop.xlane.xlu0 %711
    %v713 = vsel %vm280, %v168, 0.0
    %714 = vadd.xlane.f32.xlu0 %v713
    %v715 = vpop.xlane.xlu0 %714
    %v716 = vsel %vm280, %v169, 0.0
    %717 = vadd.xlane.f32.xlu0 %v716
    %v718 = vpop.xlane.xlu0 %717
    %v719 = vsel %vm280, %v170, 0.0
    %720 = vadd.xlane.f32.xlu0 %v719
    %v721 = vpop.xlane.xlu0 %720
    %v722 = vsel %vm280, %v171, 0.0
    %723 = vadd.xlane.f32.xlu0 %v722
    %v724 = vpop.xlane.xlu0 %723
    %v725 = vsel %vm280, %v172, 0.0
    %726 = vadd.xlane.f32.xlu0 %v725
    %v727 = vpop.xlane.xlu0 %726
    %v728 = vsel %vm280, %v173, 0.0
    %729 = vadd.xlane.f32.xlu0 %v728
    %v730 = vpop.xlane.xlu0 %729
    %v731 = vsel %vm280, %v174, 0.0
    %732 = vadd.xlane.f32.xlu0 %v731
    %v733 = vpop.xlane.xlu0 %732
    %v734 = vsel %vm280, %v175, 0.0
    %735 = vadd.xlane.f32.xlu0 %v734
    %v736 = vpop.xlane.xlu0 %735
    %v737 = vsel %vm280, %v176, 0.0
    %738 = vadd.xlane.f32.xlu0 %v737
    %v739 = vpop.xlane.xlu0 %738
    %v740 = vsel %vm280, %v177, 0.0
    %741 = vadd.xlane.f32.xlu0 %v740
    %v742 = vpop.xlane.xlu0 %741
    %v743 = vsel %vm280, %v178, 0.0
    %744 = vadd.xlane.f32.xlu0 %v743
    %v745 = vpop.xlane.xlu0 %744
    %v746 = vsel %vm280, %v179, 0.0
    %747 = vadd.xlane.f32.xlu0 %v746
    %v748 = vpop.xlane.xlu0 %747
    %v749 = vsel %vm280, %v180, 0.0
    %750 = vadd.xlane.f32.xlu0 %v749
    %v751 = vpop.xlane.xlu0 %750
    %v752 = vsel %vm280, %v181, 0.0
    %753 = vadd.xlane.f32.xlu0 %v752
    %v754 = vpop.xlane.xlu0 %753
    %v755 = vsel %vm280, %v182, 0.0
    %756 = vadd.xlane.f32.xlu0 %v755
    %v757 = vpop.xlane.xlu0 %756
    %v758 = vsel %vm280, %v183, 0.0
    %759 = vadd.xlane.f32.xlu0 %v758
    %v760 = vpop.xlane.xlu0 %759
    %v761 = vsel %vm280, %v184, 0.0
    %762 = vadd.xlane.f32.xlu0 %v761
    %v763 = vpop.xlane.xlu0 %762
    %v764 = vsel %vm280, %v185, 0.0
    %765 = vadd.xlane.f32.xlu0 %v764
    %v766 = vpop.xlane.xlu0 %765
    %v767 = vsel %vm280, %v186, 0.0
    %768 = vadd.xlane.f32.xlu0 %v767
    %v769 = vpop.xlane.xlu0 %768
    %v770 = vsel %vm280, %v187, 0.0
    %771 = vadd.xlane.f32.xlu0 %v770
    %v772 = vpop.xlane.xlu0 %771
    %v773 = vsel %vm280, %v188, 0.0
    %774 = vadd.xlane.f32.xlu0 %v773
    %v775 = vpop.xlane.xlu0 %774
    %v776 = vsel %vm280, %v189, 0.0
    %777 = vadd.xlane.f32.xlu0 %v776
    %v778 = vpop.xlane.xlu0 %777
    %v779 = vsel %vm280, %v190, 0.0
    %780 = vadd.xlane.f32.xlu0 %v779
    %v781 = vpop.xlane.xlu0 %780
    %v782 = vsel %vm280, %v191, 0.0
    %783 = vadd.xlane.f32.xlu0 %v782
    %v784 = vpop.xlane.xlu0 %783
    %v785 = vsel %vm280, %v192, 0.0
    %786 = vadd.xlane.f32.xlu0 %v785
    %v787 = vpop.xlane.xlu0 %786
    %v788 = vsel %vm280, %v193, 0.0
    %789 = vadd.xlane.f32.xlu0 %v788
    %v790 = vpop.xlane.xlu0 %789
    %v791 = vsel %vm280, %v194, 0.0
    %792 = vadd.xlane.f32.xlu0 %v791
    %v793 = vpop.xlane.xlu0 %792
    %v794 = vsel %vm280, %v195, 0.0
    %795 = vadd.xlane.f32.xlu0 %v794
    %v796 = vpop.xlane.xlu0 %795
    %v797 = vsel %vm280, %v196, 0.0
    %798 = vadd.xlane.f32.xlu0 %v797
    %v799 = vpop.xlane.xlu0 %798
    %v800 = vsel %vm280, %v197, 0.0
    %801 = vadd.xlane.f32.xlu0 %v800
    %v802 = vpop.xlane.xlu0 %801
    %v803 = vsel %vm280, %v198, 0.0
    %804 = vadd.xlane.f32.xlu0 %v803
    %v805 = vpop.xlane.xlu0 %804
    %v806 = vsel %vm280, %v199, 0.0
    %807 = vadd.xlane.f32.xlu0 %v806
    %v808 = vpop.xlane.xlu0 %807
    %v809 = vsel %vm280, %v200, 0.0
    %810 = vadd.xlane.f32.xlu0 %v809
    %v811 = vpop.xlane.xlu0 %810
    %v812 = vsel %vm280, %v201, 0.0
    %813 = vadd.xlane.f32.xlu0 %v812
    %v814 = vpop.xlane.xlu0 %813
    %v815 = vsel %vm280, %v202, 0.0
    %816 = vadd.xlane.f32.xlu0 %v815
    %v817 = vpop.xlane.xlu0 %816
    %v818 = vsel %vm280, %v203, 0.0
    %819 = vadd.xlane.f32.xlu0 %v818
    %v820 = vpop.xlane.xlu0 %819
    %v821 = vsel %vm280, %v204, 0.0
    %822 = vadd.xlane.f32.xlu0 %v821
    %v823 = vpop.xlane.xlu0 %822
    %v824 = vsel %vm280, %v205, 0.0
    %825 = vadd.xlane.f32.xlu0 %v824
    %v826 = vpop.xlane.xlu0 %825
    %v827 = vsel %vm280, %v206, 0.0
    %828 = vadd.xlane.f32.xlu0 %v827
    %v829 = vpop.xlane.xlu0 %828
    %v830 = vsel %vm280, %v207, 0.0
    %831 = vadd.xlane.f32.xlu0 %v830
    %v832 = vpop.xlane.xlu0 %831
    %v833 = vsel %vm280, %v208, 0.0
    %834 = vadd.xlane.f32.xlu0 %v833
    %v835 = vpop.xlane.xlu0 %834
    %v836 = vsel %vm280, %v209, 0.0
    %837 = vadd.xlane.f32.xlu0 %v836
    %v838 = vpop.xlane.xlu0 %837
    %v839 = vsel %vm280, %v210, 0.0
    %840 = vadd.xlane.f32.xlu0 %v839
    %v841 = vpop.xlane.xlu0 %840
    %v842 = vsel %vm280, %v211, 0.0
    %843 = vadd.xlane.f32.xlu0 %v842
    %v844 = vpop.xlane.xlu0 %843
    %v845 = vsel %vm280, %v212, 0.0
    %846 = vadd.xlane.f32.xlu0 %v845
    %v847 = vpop.xlane.xlu0 %846
    %v848 = vsel %vm280, %v213, 0.0
    %849 = vadd.xlane.f32.xlu0 %v848
    %v850 = vpop.xlane.xlu0 %849
    %v851 = vsel %vm280, %v214, 0.0
    %852 = vadd.xlane.f32.xlu0 %v851
    %v853 = vpop.xlane.xlu0 %852
    %v854 = vsel %vm280, %v215, 0.0
    %855 = vadd.xlane.f32.xlu0 %v854
    %v856 = vpop.xlane.xlu0 %855
    %v857 = vsel %vm280, %v216, 0.0
    %858 = vadd.xlane.f32.xlu0 %v857
    %v859 = vpop.xlane.xlu0 %858
    %v860 = vsel %vm280, %v217, 0.0
    %861 = vadd.xlane.f32.xlu0 %v860
    %v862 = vpop.xlane.xlu0 %861
    %v863 = vsel %vm280, %v218, 0.0
    %864 = vadd.xlane.f32.xlu0 %v863
    %v865 = vpop.xlane.xlu0 %864
    %v866 = vsel %vm280, %v219, 0.0
    %867 = vadd.xlane.f32.xlu0 %v866
    %v868 = vpop.xlane.xlu0 %867
    %v869 = vsel %vm280, %v220, 0.0
    %870 = vadd.xlane.f32.xlu0 %v869
    %v871 = vpop.xlane.xlu0 %870
    %v872 = vsel %vm280, %v221, 0.0
    %873 = vadd.xlane.f32.xlu0 %v872
    %v874 = vpop.xlane.xlu0 %873
    %v875 = vsel %vm280, %v222, 0.0
    %876 = vadd.xlane.f32.xlu0 %v875
    %v877 = vpop.xlane.xlu0 %876
    %v878 = vsel %vm280, %v223, 0.0
    %879 = vadd.xlane.f32.xlu0 %v878
    %v880 = vpop.xlane.xlu0 %879
    %v881 = vsel %vm280, %v224, 0.0
    %882 = vadd.xlane.f32.xlu0 %v881
    %v883 = vpop.xlane.xlu0 %882
    %v884 = vsel %vm280, %v225, 0.0
    %885 = vadd.xlane.f32.xlu0 %v884
    %v886 = vpop.xlane.xlu0 %885
    %v887 = vsel %vm280, %v226, 0.0
    %888 = vadd.xlane.f32.xlu0 %v887
    %v889 = vpop.xlane.xlu0 %888
    %v890 = vsel %vm280, %v227, 0.0
    %891 = vadd.xlane.f32.xlu0 %v890
    %v892 = vpop.xlane.xlu0 %891
    %v893 = vsel %vm280, %v228, 0.0
    %894 = vadd.xlane.f32.xlu0 %v893
    %v895 = vpop.xlane.xlu0 %894
    %v896 = vsel %vm280, %v229, 0.0
    %897 = vadd.xlane.f32.xlu0 %v896
    %v898 = vpop.xlane.xlu0 %897
    %v899 = vsel %vm280, %v230, 0.0
    %900 = vadd.xlane.f32.xlu0 %v899
    %v901 = vpop.xlane.xlu0 %900
    %v902 = vsel %vm280, %v231, 0.0
    %903 = vadd.xlane.f32.xlu0 %v902
    %v904 = vpop.xlane.xlu0 %903
    %v905 = vsel %vm280, %v232, 0.0
    %906 = vadd.xlane.f32.xlu0 %v905
    %v907 = vpop.xlane.xlu0 %906
    %v908 = vsel %vm280, %v233, 0.0
    %909 = vadd.xlane.f32.xlu0 %v908
    %v910 = vpop.xlane.xlu0 %909
    %v911 = vsel %vm280, %v234, 0.0
    %912 = vadd.xlane.f32.xlu0 %v911
    %v913 = vpop.xlane.xlu0 %912
    %v914 = vsel %vm280, %v235, 0.0
    %915 = vadd.xlane.f32.xlu0 %v914
    %v916 = vpop.xlane.xlu0 %915
    %v917 = vsel %vm280, %v236, 0.0
    %918 = vadd.xlane.f32.xlu0 %v917
    %v919 = vpop.xlane.xlu0 %918
    %v920 = vsel %vm280, %v237, 0.0
    %921 = vadd.xlane.f32.xlu0 %v920
    %v922 = vpop.xlane.xlu0 %921
    %v923 = vsel %vm280, %v238, 0.0
    %924 = vadd.xlane.f32.xlu0 %v923
    %v925 = vpop.xlane.xlu0 %924
    %v926 = vsel %vm280, %v239, 0.0
    %927 = vadd.xlane.f32.xlu0 %v926
    %v928 = vpop.xlane.xlu0 %927
    %v929 = vsel %vm280, %v240, 0.0
    %930 = vadd.xlane.f32.xlu0 %v929
    %v931 = vpop.xlane.xlu0 %930
    %v932 = vsel %vm280, %v241, 0.0
    %933 = vadd.xlane.f32.xlu0 %v932
    %v934 = vpop.xlane.xlu0 %933
    %v935 = vsel %vm280, %v242, 0.0
    %936 = vadd.xlane.f32.xlu0 %v935
    %v937 = vpop.xlane.xlu0 %936
    %v938 = vsel %vm280, %v243, 0.0
    %939 = vadd.xlane.f32.xlu0 %v938
    %v940 = vpop.xlane.xlu0 %939
    %v941 = vsel %vm280, %v244, 0.0
    %942 = vadd.xlane.f32.xlu0 %v941
    %v943 = vpop.xlane.xlu0 %942
    %v944 = vsel %vm280, %v245, 0.0
    %945 = vadd.xlane.f32.xlu0 %v944
    %v946 = vpop.xlane.xlu0 %945
    %v947 = vsel %vm280, %v246, 0.0
    %948 = vadd.xlane.f32.xlu0 %v947
    %v949 = vpop.xlane.xlu0 %948
    %v950 = vsel %vm280, %v247, 0.0
    %951 = vadd.xlane.f32.xlu0 %v950
    %v952 = vpop.xlane.xlu0 %951
    %v953 = vsel %vm280, %v248, 0.0
    %954 = vadd.xlane.f32.xlu0 %v953
    %v955 = vpop.xlane.xlu0 %954
    %v956 = vsel %vm280, %v249, 0.0
    %957 = vadd.xlane.f32.xlu0 %v956
    %v958 = vpop.xlane.xlu0 %957
    %v959 = vsel %vm280, %v250, 0.0
    %960 = vadd.xlane.f32.xlu0 %v959
    %v961 = vpop.xlane.xlu0 %960
    %v962 = vsel %vm280, %v251, 0.0
    %963 = vadd.xlane.f32.xlu0 %v962
    %v964 = vpop.xlane.xlu0 %963
    %v965 = vsel %vm280, %v252, 0.0
    %966 = vadd.xlane.f32.xlu0 %v965
    %v967 = vpop.xlane.xlu0 %966
    %v968 = vsel %vm280, %v253, 0.0
    %969 = vadd.xlane.f32.xlu0 %v968
    %v970 = vpop.xlane.xlu0 %969
    %v971 = vsel %vm280, %v254, 0.0
    %972 = vadd.xlane.f32.xlu0 %v971
    %v973 = vpop.xlane.xlu0 %972
    %v974 = vsel %vm280, %v255, 0.0
    %975 = vadd.xlane.f32.xlu0 %v974
    %v976 = vpop.xlane.xlu0 %975
    %v977 = vsel %vm280, %v256, 0.0
    %978 = vadd.xlane.f32.xlu0 %v977
    %v979 = vpop.xlane.xlu0 %978
    %v980 = vsel %vm280, %v257, 0.0
    %981 = vadd.xlane.f32.xlu0 %v980
    %v982 = vpop.xlane.xlu0 %981
    %v983 = vsel %vm280, %v258, 0.0
    %984 = vadd.xlane.f32.xlu0 %v983
    %v985 = vpop.xlane.xlu0 %984
    %v986 = vsel %vm280, %v259, 0.0
    %987 = vadd.xlane.f32.xlu0 %v986
    %v988 = vpop.xlane.xlu0 %987
    %v989 = vsel %vm280, %v260, 0.0
    %990 = vadd.xlane.f32.xlu0 %v989
    %v991 = vpop.xlane.xlu0 %990
    %v992 = vsel %vm280, %v261, 0.0
    %993 = vadd.xlane.f32.xlu0 %v992
    %v994 = vpop.xlane.xlu0 %993
    %v995 = vsel %vm280, %v262, 0.0
    %996 = vadd.xlane.f32.xlu0 %v995
    %v997 = vpop.xlane.xlu0 %996
    %v998 = vsel %vm280, %v263, 0.0
    %999 = vadd.xlane.f32.xlu0 %v998
    %v1000 = vpop.xlane.xlu0 %999
    %v1001 = vsel %vm280, %v264, 0.0
    %1002 = vadd.xlane.f32.xlu0 %v1001
    %v1003 = vpop.xlane.xlu0 %1002
    %v1004 = vsel %vm280, %v265, 0.0
    %1005 = vadd.xlane.f32.xlu0 %v1004
    %v1006 = vpop.xlane.xlu0 %1005
    %v1007 = vsel %vm280, %v266, 0.0
    %1008 = vadd.xlane.f32.xlu0 %v1007
    %v1009 = vpop.xlane.xlu0 %1008
    %v1010 = vsel %vm280, %v267, 0.0
    %1011 = vadd.xlane.f32.xlu0 %v1010
    %v1012 = vpop.xlane.xlu0 %1011
    %v1013 = vsel %vm280, %v268, 0.0
    %1014 = vadd.xlane.f32.xlu0 %v1013
    %v1015 = vpop.xlane.xlu0 %1014
    %v1016 = vsel %vm280, %v269, 0.0
    %1017 = vadd.xlane.f32.xlu0 %v1016
    %v1018 = vpop.xlane.xlu0 %1017
    %v1019 = vsel %vm280, %v270, 0.0
    %1020 = vadd.xlane.f32.xlu0 %v1019
    %v1021 = vpop.xlane.xlu0 %1020
    %v1022 = vsel %vm280, %v271, 0.0
    %1023 = vadd.xlane.f32.xlu0 %v1022
    %v1024 = vpop.xlane.xlu0 %1023
    %v1025 = vsel %vm280, %v272, 0.0
    %1026 = vadd.xlane.f32.xlu0 %v1025
    %v1027 = vpop.xlane.xlu0 %1026
    %v1028 = vsel %vm280, %v273, 0.0
    %1029 = vadd.xlane.f32.xlu0 %v1028
    %v1030 = vpop.xlane.xlu0 %1029
    %v1031 = vsel %vm280, %v274, 0.0
    %1032 = vadd.xlane.f32.xlu0 %v1031
    %v1033 = vpop.xlane.xlu0 %1032
    %v1034 = vsel %vm280, %v275, 0.0
    %1035 = vadd.xlane.f32.xlu0 %v1034
    %v1036 = vpop.xlane.xlu0 %1035
    %v1037 = vsel %vm280, %v276, 0.0
    %1038 = vadd.xlane.f32.xlu0 %v1037
    %v1039 = vpop.xlane.xlu0 %1038
    %v1040 = vsel %vm280, %v277, 0.0
    %1041 = vadd.xlane.f32.xlu0 %v1040
    %v1042 = vpop.xlane.xlu0 %1041
    %v1043 = vsel %vm280, %v278, 0.0
    %1044 = vadd.xlane.f32.xlu0 %v1043
    %v1045 = vpop.xlane.xlu0 %1044
    %v1046 = vsel %vm280, %v279, 0.0
    %1047 = vadd.xlane.f32.xlu0 %v1046
    %v1048 = vpop.xlane.xlu0 %1047
    %v1049 = vld [vmem:[%s2] sm:$0xff]
    %v1050 = vld [vmem:[%s2 + $0x8] sm:$0xff]
    %v1051 = vld [vmem:[%s2 + $0x10] sm:$0xff]
    %v1052 = vld [vmem:[%s2 + $0x18] sm:$0xff]
    %v1053 = vld [vmem:[%s2 + $0x20] sm:$0xff]
    %v1054 = vld [vmem:[%s2 + $0x28] sm:$0xff]
    %v1055 = vld [vmem:[%s2 + $0x30] sm:$0xff]
    %v1056 = vld [vmem:[%s2 + $0x38] sm:$0xff]
    %v1057 = vld [vmem:[%s2 + $0x40] sm:$0xff]
    %v1058 = vld [vmem:[%s2 + $0x48] sm:$0xff]
    %v1059 = vld [vmem:[%s2 + $0x50] sm:$0xff]
    %v1060 = vld [vmem:[%s2 + $0x58] sm:$0xff]
    %v1061 = vld [vmem:[%s2 + $0x60] sm:$0xff]
    %v1062 = vld [vmem:[%s2 + $0x68] sm:$0xff]
    %v1063 = vld [vmem:[%s2 + $0x70] sm:$0xff]
    %v1064 = vld [vmem:[%s2 + $0x78] sm:$0xff]
    %v1065 = vld [vmem:[%s2 + $0x80] sm:$0xff]
    %v1066 = vld [vmem:[%s2 + $0x88] sm:$0xff]
    %v1067 = vld [vmem:[%s2 + $0x90] sm:$0xff]
    %v1068 = vld [vmem:[%s2 + $0x98] sm:$0xff]
    %v1069 = vld [vmem:[%s2 + $0xa0] sm:$0xff]
    %v1070 = vld [vmem:[%s2 + $0xa8] sm:$0xff]
    %v1071 = vld [vmem:[%s2 + $0xb0] sm:$0xff]
    %v1072 = vld [vmem:[%s2 + $0xb8] sm:$0xff]
    %v1073 = vld [vmem:[%s2 + $0xc0] sm:$0xff]
    %v1074 = vld [vmem:[%s2 + $0xc8] sm:$0xff]
    %v1075 = vld [vmem:[%s2 + $0xd0] sm:$0xff]
    %v1076 = vld [vmem:[%s2 + $0xd8] sm:$0xff]
    %v1077 = vld [vmem:[%s2 + $0xe0] sm:$0xff]
    %v1078 = vld [vmem:[%s2 + $0xe8] sm:$0xff]
    %v1079 = vld [vmem:[%s2 + $0xf0] sm:$0xff]
    %v1080 = vld [vmem:[%s2 + $0xf8] sm:$0xff]
    %v1337 = vlaneseq
    %v1338 = vand.u32 %v1337, 127
    %v1339 = vperm.slane %v283, %v1338
    %v1340 = vadd.s32 %v1338, 4294967288
    %v1341 = vperm.slane %v286, %v1340
    %vm1342 = vcmask 130112
    %v1343 = vsel %vm1342, %v1341, %v1339
    %v1344 = vadd.s32 %v1338, 4294967280
    %v1345 = vperm.slane %v289, %v1344
    %vm1346 = vcmask 195712
    %v1347 = vsel %vm1346, %v1345, %v1343
    %v1348 = vadd.s32 %v1338, 4294967272
    %v1349 = vperm.slane %v292, %v1348
    %vm1350 = vcmask 261312
    %v1351 = vsel %vm1350, %v1349, %v1347
    %v1352 = vadd.s32 %v1338, 4294967264
    %v1353 = vperm.slane %v295, %v1352
    %vm1354 = vcmask 326912
    %v1355 = vsel %vm1354, %v1353, %v1351
    %v1356 = vadd.s32 %v1338, 4294967256
    %v1357 = vperm.slane %v298, %v1356
    %vm1358 = vcmask 392512
    %v1359 = vsel %vm1358, %v1357, %v1355
    %v1360 = vadd.s32 %v1338, 4294967248
    %v1361 = vperm.slane %v301, %v1360
    %vm1362 = vcmask 458112
    %v1363 = vsel %vm1362, %v1361, %v1359
    %v1364 = vadd.s32 %v1338, 4294967240
    %v1365 = vperm.slane %v304, %v1364
    %vm1366 = vcmask 523712
    %v1367 = vsel %vm1366, %v1365, %v1363
    %v1368 = vadd.s32 %v1338, 4294967232
    %v1369 = vperm.slane %v307, %v1368
    %vm1370 = vcmask 589312
    %v1371 = vsel %vm1370, %v1369, %v1367
    %v1372 = vadd.s32 %v1338, 4294967224
    %v1373 = vperm.slane %v310, %v1372
    %vm1374 = vcmask 654912
    %v1375 = vsel %vm1374, %v1373, %v1371
    %v1376 = vadd.s32 %v1338, 4294967216
    %v1377 = vperm.slane %v313, %v1376
    %vm1378 = vcmask 720512
    %v1379 = vsel %vm1378, %v1377, %v1375
    %v1380 = vadd.s32 %v1338, 4294967208
    %v1381 = vperm.slane %v316, %v1380
    %vm1382 = vcmask 786112
    %v1383 = vsel %vm1382, %v1381, %v1379
    %v1384 = vadd.s32 %v1338, 4294967200
    %v1385 = vperm.slane %v319, %v1384
    %vm1386 = vcmask 851712
    %v1387 = vsel %vm1386, %v1385, %v1383
    %v1388 = vadd.s32 %v1338, 4294967192
    %v1389 = vperm.slane %v322, %v1388
    %vm1390 = vcmask 917312
    %v1391 = vsel %vm1390, %v1389, %v1387
    %v1392 = vadd.s32 %v1338, 4294967184
    %v1393 = vperm.slane %v325, %v1392
    %vm1394 = vcmask 982912
    %v1395 = vsel %vm1394, %v1393, %v1391
    %v1396 = vadd.s32 %v1338, 4294967176
    %v1397 = vperm.slane %v328, %v1396
    %vm1398 = vcmask 1048512
    %v1399 = vsel %vm1398, %v1397, %v1395
    %v1400 = vperm.slane %v331, %v1338
    %v1401 = vperm.slane %v334, %v1340
    %v1402 = vsel %vm1342, %v1401, %v1400
    %v1403 = vperm.slane %v337, %v1344
    %v1404 = vsel %vm1346, %v1403, %v1402
    %v1405 = vperm.slane %v340, %v1348
    %v1406 = vsel %vm1350, %v1405, %v1404
    %v1407 = vperm.slane %v343, %v1352
    %v1408 = vsel %vm1354, %v1407, %v1406
    %v1409 = vperm.slane %v346, %v1356
    %v1410 = vsel %vm1358, %v1409, %v1408
    %v1411 = vperm.slane %v349, %v1360
    %v1412 = vsel %vm1362, %v1411, %v1410
    %v1413 = vperm.slane %v352, %v1364
    %v1414 = vsel %vm1366, %v1413, %v1412
    %v1415 = vperm.slane %v355, %v1368
    %v1416 = vsel %vm1370, %v1415, %v1414
    %v1417 = vperm.slane %v358, %v1372
    %v1418 = vsel %vm1374, %v1417, %v1416
    %v1419 = vperm.slane %v361, %v1376
    %v1420 = vsel %vm1378, %v1419, %v1418
    %v1421 = vperm.slane %v364, %v1380
    %v1422 = vsel %vm1382, %v1421, %v1420
    %v1423 = vperm.slane %v367, %v1384
    %v1424 = vsel %vm1386, %v1423, %v1422
    %v1425 = vperm.slane %v370, %v1388
    %v1426 = vsel %vm1390, %v1425, %v1424
    %v1427 = vperm.slane %v373, %v1392
    %v1428 = vsel %vm1394, %v1427, %v1426
    %v1429 = vperm.slane %v376, %v1396
    %v1430 = vsel %vm1398, %v1429, %v1428
    %v1431 = vperm.slane %v379, %v1338
    %v1432 = vperm.slane %v382, %v1340
    %v1433 = vsel %vm1342, %v1432, %v1431
    %v1434 = vperm.slane %v385, %v1344
    %v1435 = vsel %vm1346, %v1434, %v1433
    %v1436 = vperm.slane %v388, %v1348
    %v1437 = vsel %vm1350, %v1436, %v1435
    %v1438 = vperm.slane %v391, %v1352
    %v1439 = vsel %vm1354, %v1438, %v1437
    %v1440 = vperm.slane %v394, %v1356
    %v1441 = vsel %vm1358, %v1440, %v1439
    %v1442 = vperm.slane %v397, %v1360
    %v1443 = vsel %vm1362, %v1442, %v1441
    %v1444 = vperm.slane %v400, %v1364
    %v1445 = vsel %vm1366, %v1444, %v1443
    %v1446 = vperm.slane %v403, %v1368
    %v1447 = vsel %vm1370, %v1446, %v1445
    %v1448 = vperm.slane %v406, %v1372
    %v1449 = vsel %vm1374, %v1448, %v1447
    %v1450 = vperm.slane %v409, %v1376
    %v1451 = vsel %vm1378, %v1450, %v1449
    %v1452 = vperm.slane %v412, %v1380
    %v1453 = vsel %vm1382, %v1452, %v1451
    %v1454 = vperm.slane %v415, %v1384
    %v1455 = vsel %vm1386, %v1454, %v1453
    %v1456 = vperm.slane %v418, %v1388
    %v1457 = vsel %vm1390, %v1456, %v1455
    %v1458 = vperm.slane %v421, %v1392
    %v1459 = vsel %vm1394, %v1458, %v1457
    %v1460 = vperm.slane %v424, %v1396
    %v1461 = vsel %vm1398, %v1460, %v1459
    %v1462 = vperm.slane %v427, %v1338
    %v1463 = vperm.slane %v430, %v1340
    %v1464 = vsel %vm1342, %v1463, %v1462
    %v1465 = vperm.slane %v433, %v1344
    %v1466 = vsel %vm1346, %v1465, %v1464
    %v1467 = vperm.slane %v436, %v1348
    %v1468 = vsel %vm1350, %v1467, %v1466
    %v1469 = vperm.slane %v439, %v1352
    %v1470 = vsel %vm1354, %v1469, %v1468
    %v1471 = vperm.slane %v442, %v1356
    %v1472 = vsel %vm1358, %v1471, %v1470
    %v1473 = vperm.slane %v445, %v1360
    %v1474 = vsel %vm1362, %v1473, %v1472
    %v1475 = vperm.slane %v448, %v1364
    %v1476 = vsel %vm1366, %v1475, %v1474
    %v1477 = vperm.slane %v451, %v1368
    %v1478 = vsel %vm1370, %v1477, %v1476
    %v1479 = vperm.slane %v454, %v1372
    %v1480 = vsel %vm1374, %v1479, %v1478
    %v1481 = vperm.slane %v457, %v1376
    %v1482 = vsel %vm1378, %v1481, %v1480
    %v1483 = vperm.slane %v460, %v1380
    %v1484 = vsel %vm1382, %v1483, %v1482
    %v1485 = vperm.slane %v463, %v1384
    %v1486 = vsel %vm1386, %v1485, %v1484
    %v1487 = vperm.slane %v466, %v1388
    %v1488 = vsel %vm1390, %v1487, %v1486
    %v1489 = vperm.slane %v469, %v1392
    %v1490 = vsel %vm1394, %v1489, %v1488
    %v1491 = vperm.slane %v472, %v1396
    %v1492 = vsel %vm1398, %v1491, %v1490
    %v1493 = vperm.slane %v475, %v1338
    %v1494 = vperm.slane %v478, %v1340
    %v1495 = vsel %vm1342, %v1494, %v1493
    %v1496 = vperm.slane %v481, %v1344
    %v1497 = vsel %vm1346, %v1496, %v1495
    %v1498 = vperm.slane %v484, %v1348
    %v1499 = vsel %vm1350, %v1498, %v1497
    %v1500 = vperm.slane %v487, %v1352
    %v1501 = vsel %vm1354, %v1500, %v1499
    %v1502 = vperm.slane %v490, %v1356
    %v1503 = vsel %vm1358, %v1502, %v1501
    %v1504 = vperm.slane %v493, %v1360
    %v1505 = vsel %vm1362, %v1504, %v1503
    %v1506 = vperm.slane %v496, %v1364
    %v1507 = vsel %vm1366, %v1506, %v1505
    %v1508 = vperm.slane %v499, %v1368
    %v1509 = vsel %vm1370, %v1508, %v1507
    %v1510 = vperm.slane %v502, %v1372
    %v1511 = vsel %vm1374, %v1510, %v1509
    %v1512 = vperm.slane %v505, %v1376
    %v1513 = vsel %vm1378, %v1512, %v1511
    %v1514 = vperm.slane %v508, %v1380
    %v1515 = vsel %vm1382, %v1514, %v1513
    %v1516 = vperm.slane %v511, %v1384
    %v1517 = vsel %vm1386, %v1516, %v1515
    %v1518 = vperm.slane %v514, %v1388
    %v1519 = vsel %vm1390, %v1518, %v1517
    %v1520 = vperm.slane %v517, %v1392
    %v1521 = vsel %vm1394, %v1520, %v1519
    %v1522 = vperm.slane %v520, %v1396
    %v1523 = vsel %vm1398, %v1522, %v1521
    %v1524 = vperm.slane %v523, %v1338
    %v1525 = vperm.slane %v526, %v1340
    %v1526 = vsel %vm1342, %v1525, %v1524
    %v1527 = vperm.slane %v529, %v1344
    %v1528 = vsel %vm1346, %v1527, %v1526
    %v1529 = vperm.slane %v532, %v1348
    %v1530 = vsel %vm1350, %v1529, %v1528
    %v1531 = vperm.slane %v535, %v1352
    %v1532 = vsel %vm1354, %v1531, %v1530
    %v1533 = vperm.slane %v538, %v1356
    %v1534 = vsel %vm1358, %v1533, %v1532
    %v1535 = vperm.slane %v541, %v1360
    %v1536 = vsel %vm1362, %v1535, %v1534
    %v1537 = vperm.slane %v544, %v1364
    %v1538 = vsel %vm1366, %v1537, %v1536
    %v1539 = vperm.slane %v547, %v1368
    %v1540 = vsel %vm1370, %v1539, %v1538
    %v1541 = vperm.slane %v550, %v1372
    %v1542 = vsel %vm1374, %v1541, %v1540
    %v1543 = vperm.slane %v553, %v1376
    %v1544 = vsel %vm1378, %v1543, %v1542
    %v1545 = vperm.slane %v556, %v1380
    %v1546 = vsel %vm1382, %v1545, %v1544
    %v1547 = vperm.slane %v559, %v1384
    %v1548 = vsel %vm1386, %v1547, %v1546
    %v1549 = vperm.slane %v562, %v1388
    %v1550 = vsel %vm1390, %v1549, %v1548
    %v1551 = vperm.slane %v565, %v1392
    %v1552 = vsel %vm1394, %v1551, %v1550
    %v1553 = vperm.slane %v568, %v1396
    %v1554 = vsel %vm1398, %v1553, %v1552
    %v1555 = vperm.slane %v571, %v1338
    %v1556 = vperm.slane %v574, %v1340
    %v1557 = vsel %vm1342, %v1556, %v1555
    %v1558 = vperm.slane %v577, %v1344
    %v1559 = vsel %vm1346, %v1558, %v1557
    %v1560 = vperm.slane %v580, %v1348
    %v1561 = vsel %vm1350, %v1560, %v1559
    %v1562 = vperm.slane %v583, %v1352
    %v1563 = vsel %vm1354, %v1562, %v1561
    %v1564 = vperm.slane %v586, %v1356
    %v1565 = vsel %vm1358, %v1564, %v1563
    %v1566 = vperm.slane %v589, %v1360
    %v1567 = vsel %vm1362, %v1566, %v1565
    %v1568 = vperm.slane %v592, %v1364
    %v1569 = vsel %vm1366, %v1568, %v1567
    %v1570 = vperm.slane %v595, %v1368
    %v1571 = vsel %vm1370, %v1570, %v1569
    %v1572 = vperm.slane %v598, %v1372
    %v1573 = vsel %vm1374, %v1572, %v1571
    %v1574 = vperm.slane %v601, %v1376
    %v1575 = vsel %vm1378, %v1574, %v1573
    %v1576 = vperm.slane %v604, %v1380
    %v1577 = vsel %vm1382, %v1576, %v1575
    %v1578 = vperm.slane %v607, %v1384
    %v1579 = vsel %vm1386, %v1578, %v1577
    %v1580 = vperm.slane %v610, %v1388
    %v1581 = vsel %vm1390, %v1580, %v1579
    %v1582 = vperm.slane %v613, %v1392
    %v1583 = vsel %vm1394, %v1582, %v1581
    %v1584 = vperm.slane %v616, %v1396
    %v1585 = vsel %vm1398, %v1584, %v1583
    %v1586 = vperm.slane %v619, %v1338
    %v1587 = vperm.slane %v622, %v1340
    %v1588 = vsel %vm1342, %v1587, %v1586
    %v1589 = vperm.slane %v625, %v1344
    %v1590 = vsel %vm1346, %v1589, %v1588
    %v1591 = vperm.slane %v628, %v1348
    %v1592 = vsel %vm1350, %v1591, %v1590
    %v1593 = vperm.slane %v631, %v1352
    %v1594 = vsel %vm1354, %v1593, %v1592
    %v1595 = vperm.slane %v634, %v1356
    %v1596 = vsel %vm1358, %v1595, %v1594
    %v1597 = vperm.slane %v637, %v1360
    %v1598 = vsel %vm1362, %v1597, %v1596
    %v1599 = vperm.slane %v640, %v1364
    %v1600 = vsel %vm1366, %v1599, %v1598
    %v1601 = vperm.slane %v643, %v1368
    %v1602 = vsel %vm1370, %v1601, %v1600
    %v1603 = vperm.slane %v646, %v1372
    %v1604 = vsel %vm1374, %v1603, %v1602
    %v1605 = vperm.slane %v649, %v1376
    %v1606 = vsel %vm1378, %v1605, %v1604
    %v1607 = vperm.slane %v652, %v1380
    %v1608 = vsel %vm1382, %v1607, %v1606
    %v1609 = vperm.slane %v655, %v1384
    %v1610 = vsel %vm1386, %v1609, %v1608
    %v1611 = vperm.slane %v658, %v1388
    %v1612 = vsel %vm1390, %v1611, %v1610
    %v1613 = vperm.slane %v661, %v1392
    %v1614 = vsel %vm1394, %v1613, %v1612
    %v1615 = vperm.slane %v664, %v1396
    %v1616 = vsel %vm1398, %v1615, %v1614
    %v1617 = vperm.slane %v667, %v1338
    %v1618 = vperm.slane %v670, %v1340
    %v1619 = vsel %vm1342, %v1618, %v1617
    %v1620 = vperm.slane %v673, %v1344
    %v1621 = vsel %vm1346, %v1620, %v1619
    %v1622 = vperm.slane %v676, %v1348
    %v1623 = vsel %vm1350, %v1622, %v1621
    %v1624 = vperm.slane %v679, %v1352
    %v1625 = vsel %vm1354, %v1624, %v1623
    %v1626 = vperm.slane %v682, %v1356
    %v1627 = vsel %vm1358, %v1626, %v1625
    %v1628 = vperm.slane %v685, %v1360
    %v1629 = vsel %vm1362, %v1628, %v1627
    %v1630 = vperm.slane %v688, %v1364
    %v1631 = vsel %vm1366, %v1630, %v1629
    %v1632 = vperm.slane %v691, %v1368
    %v1633 = vsel %vm1370, %v1632, %v1631
    %v1634 = vperm.slane %v694, %v1372
    %v1635 = vsel %vm1374, %v1634, %v1633
    %v1636 = vperm.slane %v697, %v1376
    %v1637 = vsel %vm1378, %v1636, %v1635
    %v1638 = vperm.slane %v700, %v1380
    %v1639 = vsel %vm1382, %v1638, %v1637
    %v1640 = vperm.slane %v703, %v1384
    %v1641 = vsel %vm1386, %v1640, %v1639
    %v1642 = vperm.slane %v706, %v1388
    %v1643 = vsel %vm1390, %v1642, %v1641
    %v1644 = vperm.slane %v709, %v1392
    %v1645 = vsel %vm1394, %v1644, %v1643
    %v1646 = vperm.slane %v712, %v1396
    %v1647 = vsel %vm1398, %v1646, %v1645
    %v1648 = vperm.slane %v715, %v1338
    %v1649 = vperm.slane %v718, %v1340
    %v1650 = vsel %vm1342, %v1649, %v1648
    %v1651 = vperm.slane %v721, %v1344
    %v1652 = vsel %vm1346, %v1651, %v1650
    %v1653 = vperm.slane %v724, %v1348
    %v1654 = vsel %vm1350, %v1653, %v1652
    %v1655 = vperm.slane %v727, %v1352
    %v1656 = vsel %vm1354, %v1655, %v1654
    %v1657 = vperm.slane %v730, %v1356
    %v1658 = vsel %vm1358, %v1657, %v1656
    %v1659 = vperm.slane %v733, %v1360
    %v1660 = vsel %vm1362, %v1659, %v1658
    %v1661 = vperm.slane %v736, %v1364
    %v1662 = vsel %vm1366, %v1661, %v1660
    %v1663 = vperm.slane %v739, %v1368
    %v1664 = vsel %vm1370, %v1663, %v1662
    %v1665 = vperm.slane %v742, %v1372
    %v1666 = vsel %vm1374, %v1665, %v1664
    %v1667 = vperm.slane %v745, %v1376
    %v1668 = vsel %vm1378, %v1667, %v1666
    %v1669 = vperm.slane %v748, %v1380
    %v1670 = vsel %vm1382, %v1669, %v1668
    %v1671 = vperm.slane %v751, %v1384
    %v1672 = vsel %vm1386, %v1671, %v1670
    %v1673 = vperm.slane %v754, %v1388
    %v1674 = vsel %vm1390, %v1673, %v1672
    %v1675 = vperm.slane %v757, %v1392
    %v1676 = vsel %vm1394, %v1675, %v1674
    %v1677 = vperm.slane %v760, %v1396
    %v1678 = vsel %vm1398, %v1677, %v1676
    %v1679 = vperm.slane %v763, %v1338
    %v1680 = vperm.slane %v766, %v1340
    %v1681 = vsel %vm1342, %v1680, %v1679
    %v1682 = vperm.slane %v769, %v1344
    %v1683 = vsel %vm1346, %v1682, %v1681
    %v1684 = vperm.slane %v772, %v1348
    %v1685 = vsel %vm1350, %v1684, %v1683
    %v1686 = vperm.slane %v775, %v1352
    %v1687 = vsel %vm1354, %v1686, %v1685
    %v1688 = vperm.slane %v778, %v1356
    %v1689 = vsel %vm1358, %v1688, %v1687
    %v1690 = vperm.slane %v781, %v1360
    %v1691 = vsel %vm1362, %v1690, %v1689
    %v1692 = vperm.slane %v784, %v1364
    %v1693 = vsel %vm1366, %v1692, %v1691
    %v1694 = vperm.slane %v787, %v1368
    %v1695 = vsel %vm1370, %v1694, %v1693
    %v1696 = vperm.slane %v790, %v1372
    %v1697 = vsel %vm1374, %v1696, %v1695
    %v1698 = vperm.slane %v793, %v1376
    %v1699 = vsel %vm1378, %v1698, %v1697
    %v1700 = vperm.slane %v796, %v1380
    %v1701 = vsel %vm1382, %v1700, %v1699
    %v1702 = vperm.slane %v799, %v1384
    %v1703 = vsel %vm1386, %v1702, %v1701
    %v1704 = vperm.slane %v802, %v1388
    %v1705 = vsel %vm1390, %v1704, %v1703
    %v1706 = vperm.slane %v805, %v1392
    %v1707 = vsel %vm1394, %v1706, %v1705
    %v1708 = vperm.slane %v808, %v1396
    %v1709 = vsel %vm1398, %v1708, %v1707
    %v1710 = vperm.slane %v811, %v1338
    %v1711 = vperm.slane %v814, %v1340
    %v1712 = vsel %vm1342, %v1711, %v1710
    %v1713 = vperm.slane %v817, %v1344
    %v1714 = vsel %vm1346, %v1713, %v1712
    %v1715 = vperm.slane %v820, %v1348
    %v1716 = vsel %vm1350, %v1715, %v1714
    %v1717 = vperm.slane %v823, %v1352
    %v1718 = vsel %vm1354, %v1717, %v1716
    %v1719 = vperm.slane %v826, %v1356
    %v1720 = vsel %vm1358, %v1719, %v1718
    %v1721 = vperm.slane %v829, %v1360
    %v1722 = vsel %vm1362, %v1721, %v1720
    %v1723 = vperm.slane %v832, %v1364
    %v1724 = vsel %vm1366, %v1723, %v1722
    %v1725 = vperm.slane %v835, %v1368
    %v1726 = vsel %vm1370, %v1725, %v1724
    %v1727 = vperm.slane %v838, %v1372
    %v1728 = vsel %vm1374, %v1727, %v1726
    %v1729 = vperm.slane %v841, %v1376
    %v1730 = vsel %vm1378, %v1729, %v1728
    %v1731 = vperm.slane %v844, %v1380
    %v1732 = vsel %vm1382, %v1731, %v1730
    %v1733 = vperm.slane %v847, %v1384
    %v1734 = vsel %vm1386, %v1733, %v1732
    %v1735 = vperm.slane %v850, %v1388
    %v1736 = vsel %vm1390, %v1735, %v1734
    %v1737 = vperm.slane %v853, %v1392
    %v1738 = vsel %vm1394, %v1737, %v1736
    %v1739 = vperm.slane %v856, %v1396
    %v1740 = vsel %vm1398, %v1739, %v1738
    %v1741 = vperm.slane %v859, %v1338
    %v1742 = vperm.slane %v862, %v1340
    %v1743 = vsel %vm1342, %v1742, %v1741
    %v1744 = vperm.slane %v865, %v1344
    %v1745 = vsel %vm1346, %v1744, %v1743
    %v1746 = vperm.slane %v868, %v1348
    %v1747 = vsel %vm1350, %v1746, %v1745
    %v1748 = vperm.slane %v871, %v1352
    %v1749 = vsel %vm1354, %v1748, %v1747
    %v1750 = vperm.slane %v874, %v1356
    %v1751 = vsel %vm1358, %v1750, %v1749
    %v1752 = vperm.slane %v877, %v1360
    %v1753 = vsel %vm1362, %v1752, %v1751
    %v1754 = vperm.slane %v880, %v1364
    %v1755 = vsel %vm1366, %v1754, %v1753
    %v1756 = vperm.slane %v883, %v1368
    %v1757 = vsel %vm1370, %v1756, %v1755
    %v1758 = vperm.slane %v886, %v1372
    %v1759 = vsel %vm1374, %v1758, %v1757
    %v1760 = vperm.slane %v889, %v1376
    %v1761 = vsel %vm1378, %v1760, %v1759
    %v1762 = vperm.slane %v892, %v1380
    %v1763 = vsel %vm1382, %v1762, %v1761
    %v1764 = vperm.slane %v895, %v1384
    %v1765 = vsel %vm1386, %v1764, %v1763
    %v1766 = vperm.slane %v898, %v1388
    %v1767 = vsel %vm1390, %v1766, %v1765
    %v1768 = vperm.slane %v901, %v1392
    %v1769 = vsel %vm1394, %v1768, %v1767
    %v1770 = vperm.slane %v904, %v1396
    %v1771 = vsel %vm1398, %v1770, %v1769
    %v1772 = vperm.slane %v907, %v1338
    %v1773 = vperm.slane %v910, %v1340
    %v1774 = vsel %vm1342, %v1773, %v1772
    %v1775 = vperm.slane %v913, %v1344
    %v1776 = vsel %vm1346, %v1775, %v1774
    %v1777 = vperm.slane %v916, %v1348
    %v1778 = vsel %vm1350, %v1777, %v1776
    %v1779 = vperm.slane %v919, %v1352
    %v1780 = vsel %vm1354, %v1779, %v1778
    %v1781 = vperm.slane %v922, %v1356
    %v1782 = vsel %vm1358, %v1781, %v1780
    %v1783 = vperm.slane %v925, %v1360
    %v1784 = vsel %vm1362, %v1783, %v1782
    %v1785 = vperm.slane %v928, %v1364
    %v1786 = vsel %vm1366, %v1785, %v1784
    %v1787 = vperm.slane %v931, %v1368
    %v1788 = vsel %vm1370, %v1787, %v1786
    %v1789 = vperm.slane %v934, %v1372
    %v1790 = vsel %vm1374, %v1789, %v1788
    %v1791 = vperm.slane %v937, %v1376
    %v1792 = vsel %vm1378, %v1791, %v1790
    %v1793 = vperm.slane %v940, %v1380
    %v1794 = vsel %vm1382, %v1793, %v1792
    %v1795 = vperm.slane %v943, %v1384
    %v1796 = vsel %vm1386, %v1795, %v1794
    %v1797 = vperm.slane %v946, %v1388
    %v1798 = vsel %vm1390, %v1797, %v1796
    %v1799 = vperm.slane %v949, %v1392
    %v1800 = vsel %vm1394, %v1799, %v1798
    %v1801 = vperm.slane %v952, %v1396
    %v1802 = vsel %vm1398, %v1801, %v1800
    %v1803 = vperm.slane %v955, %v1338
    %v1804 = vperm.slane %v958, %v1340
    %v1805 = vsel %vm1342, %v1804, %v1803
    %v1806 = vperm.slane %v961, %v1344
    %v1807 = vsel %vm1346, %v1806, %v1805
    %v1808 = vperm.slane %v964, %v1348
    %v1809 = vsel %vm1350, %v1808, %v1807
    %v1810 = vperm.slane %v967, %v1352
    %v1811 = vsel %vm1354, %v1810, %v1809
    %v1812 = vperm.slane %v970, %v1356
    %v1813 = vsel %vm1358, %v1812, %v1811
    %v1814 = vperm.slane %v973, %v1360
    %v1815 = vsel %vm1362, %v1814, %v1813
    %v1816 = vperm.slane %v976, %v1364
    %v1817 = vsel %vm1366, %v1816, %v1815
    %v1818 = vperm.slane %v979, %v1368
    %v1819 = vsel %vm1370, %v1818, %v1817
    %v1820 = vperm.slane %v982, %v1372
    %v1821 = vsel %vm1374, %v1820, %v1819
    %v1822 = vperm.slane %v985, %v1376
    %v1823 = vsel %vm1378, %v1822, %v1821
    %v1824 = vperm.slane %v988, %v1380
    %v1825 = vsel %vm1382, %v1824, %v1823
    %v1826 = vperm.slane %v991, %v1384
    %v1827 = vsel %vm1386, %v1826, %v1825
    %v1828 = vperm.slane %v994, %v1388
    %v1829 = vsel %vm1390, %v1828, %v1827
    %v1830 = vperm.slane %v997, %v1392
    %v1831 = vsel %vm1394, %v1830, %v1829
    %v1832 = vperm.slane %v1000, %v1396
    %v1833 = vsel %vm1398, %v1832, %v1831
    %v1834 = vperm.slane %v1003, %v1338
    %v1835 = vperm.slane %v1006, %v1340
    %v1836 = vsel %vm1342, %v1835, %v1834
    %v1837 = vperm.slane %v1009, %v1344
    %v1838 = vsel %vm1346, %v1837, %v1836
    %v1839 = vperm.slane %v1012, %v1348
    %v1840 = vsel %vm1350, %v1839, %v1838
    %v1841 = vperm.slane %v1015, %v1352
    %v1842 = vsel %vm1354, %v1841, %v1840
    %v1843 = vperm.slane %v1018, %v1356
    %v1844 = vsel %vm1358, %v1843, %v1842
    %v1845 = vperm.slane %v1021, %v1360
    %v1846 = vsel %vm1362, %v1845, %v1844
    %v1847 = vperm.slane %v1024, %v1364
    %v1848 = vsel %vm1366, %v1847, %v1846
    %v1849 = vperm.slane %v1027, %v1368
    %v1850 = vsel %vm1370, %v1849, %v1848
    %v1851 = vperm.slane %v1030, %v1372
    %v1852 = vsel %vm1374, %v1851, %v1850
    %v1853 = vperm.slane %v1033, %v1376
    %v1854 = vsel %vm1378, %v1853, %v1852
    %v1855 = vperm.slane %v1036, %v1380
    %v1856 = vsel %vm1382, %v1855, %v1854
    %v1857 = vperm.slane %v1039, %v1384
    %v1858 = vsel %vm1386, %v1857, %v1856
    %v1859 = vperm.slane %v1042, %v1388
    %v1860 = vsel %vm1390, %v1859, %v1858
    %v1861 = vperm.slane %v1045, %v1392
    %v1862 = vsel %vm1394, %v1861, %v1860
    %v1863 = vperm.slane %v1048, %v1396
    %v1864 = vsel %vm1398, %v1863, %v1862
    %vm1865 = vcmask 1041409
    %v1866 = vsel %vm1865, %v1461, %v1399
    %vm1867 = vcmask 1042434
    %v1868 = vsel %vm1867, %v1523, %v1866
    %vm1869 = vcmask 1043459
    %v1870 = vsel %vm1869, %v1585, %v1868
    %vm1871 = vcmask 1044484
    %v1872 = vsel %vm1871, %v1647, %v1870
    %vm1873 = vcmask 1045509
    %v1874 = vsel %vm1873, %v1709, %v1872
    %vm1875 = vcmask 1046534
    %v1876 = vsel %vm1875, %v1771, %v1874
    %vm1877 = vcmask 1047559
    %v1878 = vsel %vm1877, %v1833, %v1876
    %v1879 = vsel %vm1865, %v1492, %v1430
    %v1880 = vsel %vm1867, %v1554, %v1879
    %v1881 = vsel %vm1869, %v1616, %v1880
    %v1882 = vsel %vm1871, %v1678, %v1881
    %v1883 = vsel %vm1873, %v1740, %v1882
    %v1884 = vsel %vm1875, %v1802, %v1883
    %v1885 = vsel %vm1877, %v1864, %v1884
    %1888 = vmatpush.msra.mxu0 %v1064
    %1889 = vmatpush.msra.mxu0 %v1063
    %1890 = vmatpush.msra.mxu0 %v1062
    %1891 = vmatpush.msra.mxu0 %v1061
    %1892 = vmatpush.msra.mxu0 %v1060
    %1893 = vmatpush.msra.mxu0 %v1059
    %1894 = vmatpush.msra.mxu0 %v1058
    %1895 = vmatpush.msra.mxu0 %v1057
    %1896 = vmatpush.msra.mxu0 %v1056
    %1897 = vmatpush.msra.mxu0 %v1055
    %1898 = vmatpush.msra.mxu0 %v1054
    %1899 = vmatpush.msra.mxu0 %v1053
    %1900 = vmatpush.msra.mxu0 %v1052
    %1901 = vmatpush.msra.mxu0 %v1051
    %1902 = vmatpush.msra.mxu0 %v1050
    %1903 = vmatpush.msra.mxu0 %v1049
    %1904 = vmatmul.f32.gmra.mxu0 %v1878
    %v1905 = vpop.f32.mrf.mxu0
    %v1906 = vadd.f32 0.0, %v1905
    %1907 = vdwg.mxu0
    %1908 = vmatpush.msra.mxu0 %v1080
    %1909 = vmatpush.msra.mxu0 %v1079
    %1910 = vmatpush.msra.mxu0 %v1078
    %1911 = vmatpush.msra.mxu0 %v1077
    %1912 = vmatpush.msra.mxu0 %v1076
    %1913 = vmatpush.msra.mxu0 %v1075
    %1914 = vmatpush.msra.mxu0 %v1074
    %1915 = vmatpush.msra.mxu0 %v1073
    %1916 = vmatpush.msra.mxu0 %v1072
    %1917 = vmatpush.msra.mxu0 %v1071
    %1918 = vmatpush.msra.mxu0 %v1070
    %1919 = vmatpush.msra.mxu0 %v1069
    %1920 = vmatpush.msra.mxu0 %v1068
    %1921 = vmatpush.msra.mxu0 %v1067
    %1922 = vmatpush.msra.mxu0 %v1066
    %1923 = vmatpush.msra.mxu0 %v1065
    %1924 = vmatmul.f32.gmra.mxu0 %v1885
    %v1925 = vpop.f32.mrf.mxu0
    %v1926 = vadd.f32 %v1906, %v1925
    %1927 = vdwg.mxu0
    %v1928 = vlaneseq
    %v1929 = vshrl.u32 %v1928, 7
    %vm1930 = vcmp.lt.s32.totalorder %v1929, 4
    %v1931 = vsel %vm1930, 1, 0
    %v1932 = vcvt.s32.f32 %v1931
    %v1933 = vmul.f32 %v1926, %v1932
    %v1934 = vrot.slane %v1933, 4
    %v1935 = vadd.f32 %v1933, %v1934
    %v1936 = vrot.slane %v1935, 2
    %v1937 = vadd.f32 %v1935, %v1936
    %v1938 = vrot.slane %v1937, 1
    %v1939 = vadd.f32 %v1937, %v1938
    %v1940 = vmul.f32 %v1939, 0.25
    %v1941 = vsub.f32 %v1933, %v1940
    %v1942 = vmul.f32 %v1941, %v1932
    %v1943 = vmul.f32 %v1942, %v1942
    %v1944 = vrot.slane %v1943, 4
    %v1945 = vadd.f32 %v1943, %v1944
    %v1946 = vrot.slane %v1945, 2
    %v1947 = vadd.f32 %v1945, %v1946
    %v1948 = vrot.slane %v1947, 1
    %v1949 = vadd.f32 %v1947, %v1948
    %v1950 = vmul.f32 %v1949, 0.25
    %v1951 = vld [vmem:[%s3] sm:$0x3]
    %v1952 = vperm.slane %v1951, 0
    %v1953 = vmul.f32 %v1952, %v1942
    %v1954 = vadd.f32 %v1950, 1e-05
    %v1955 = vrsqrt.pop %v1954
    %v1956 = vmul.f32 %v1955, %v1954
    %v1957 = vmul.f32 %v1956, %v1955
    %v1958 = vmul.f32 0.5, %v1957
    %v1959 = vsub.f32 1.5, %v1958
    %v1960 = vmul.f32 %v1955, %v1959
    %vm1961 = vweird.f32 %v1954
    %vm1962 = vweird.f32 %v1955
    %vm1963 = vmor %vm1961, %vm1962
    %v1964 = vsel %vm1963, %v1955, %v1960
    %v1965 = vmul.f32 %v1953, %v1964
    %v1966 = vperm.slane %v1951, 1
    %v1967 = vadd.f32 %v1965, %v1966
    %v1968 = vld [vmem:[%s1] sm:$0xff]
    %v1969 = vmul.f32 %v1967, %v1968
    %v1970 = vld [vmem:[%s4] sm:$0xff]
    %v1971 = vld [vmem:[%s4 + $0x8] sm:$0xff]
    %v1972 = vld [vmem:[%s4 + $0x10] sm:$0xff]
    %v1973 = vld [vmem:[%s4 + $0x18] sm:$0xff]
    %v1974 = vld [vmem:[%s4 + $0x20] sm:$0xff]
    %v1975 = vld [vmem:[%s4 + $0x28] sm:$0xff]
    %v1976 = vld [vmem:[%s4 + $0x30] sm:$0xff]
    %v1977 = vld [vmem:[%s4 + $0x38] sm:$0xff]
    %v1978 = vld [vmem:[%s4 + $0x40] sm:$0xff]
    %v1979 = vld [vmem:[%s4 + $0x48] sm:$0xff]
    %v1980 = vld [vmem:[%s4 + $0x50] sm:$0xff]
    %v1981 = vld [vmem:[%s4 + $0x58] sm:$0xff]
    %v1982 = vld [vmem:[%s4 + $0x60] sm:$0xff]
    %v1983 = vld [vmem:[%s4 + $0x68] sm:$0xff]
    %v1984 = vld [vmem:[%s4 + $0x70] sm:$0xff]
    %v1985 = vld [vmem:[%s4 + $0x78] sm:$0xff]
    %v1986 = vld [vmem:[%s5] sm:$0x1]
    %v1988 = vperm.slane %v1986, 0
    %1990 = vmatpush.msra.mxu0 %v1985
    %1991 = vmatpush.msra.mxu0 %v1984
    %1992 = vmatpush.msra.mxu0 %v1983
    %1993 = vmatpush.msra.mxu0 %v1982
    %1994 = vmatpush.msra.mxu0 %v1981
    %1995 = vmatpush.msra.mxu0 %v1980
    %1996 = vmatpush.msra.mxu0 %v1979
    %1997 = vmatpush.msra.mxu0 %v1978
    %1998 = vmatpush.msra.mxu0 %v1977
    %1999 = vmatpush.msra.mxu0 %v1976
    %2000 = vmatpush.msra.mxu0 %v1975
    %2001 = vmatpush.msra.mxu0 %v1974
    %2002 = vmatpush.msra.mxu0 %v1973
    %2003 = vmatpush.msra.mxu0 %v1972
    %2004 = vmatpush.msra.mxu0 %v1971
    %2005 = vmatpush.msra.mxu0 %v1970
    %2006 = vmatmul.f32.gmra.mxu0 %v1969
    %v2007 = vpop.f32.mrf.mxu0
    %v2008 = vadd.f32 %v1988, %v2007
    %2009 = vdwg.mxu0
    %2010 = vst [vmem:[#allocation2] sm:$0xff] %v2008
    // Predicated region
    $region26: #{tpu_custom_call.1} parent=1 // pred_check
      _
    $region27: #{tpu_custom_call.1} parent=1 // pred_check_branch
      %2012 = sbr.rel (0) target = $region29
    $region28: #{tpu_custom_call.1} parent=1 // pred_region
      %2014 = vsyncadd [#allocation3], 0
      %s2016 = sshll.u32 [#allocation2], 4
      %s2017 = int_to_ptr.vmem [resolvable:$true] %s2016
      %s2018 = sshll.u32 %s6, 4
      %s2019 = int_to_ptr.hbm [resolvable:$true] %s2018
      %2021 = dma.vmem_to_hbm [thread:$0]  %s2017, 128, %s2019, [#allocation3]
    $region29: #{tpu_custom_call.1} parent=1 // pred_fallthru
      _
    // Predicated region
    $region30: #{tpu_custom_call.1} parent=1 // pred_check
      _
    $region31: #{tpu_custom_call.1} parent=1 // pred_check_branch
      %2023 = sbr.rel (0) target = $region33
    $region32: #{tpu_custom_call.1} parent=1 // pred_region
      %2025 = dma.done [#allocation3], 128
    $region33: #{tpu_custom_call.1} parent=1 // pred_fallthru
      _
    %2026 = vsyncpa [#allocation3], 1

</llo_original>
